<compile_context>
chip_gen: v6e
topology: v6e:2x2x1
jax: 0.10.0
libtpu: 0.0.40
codegen_flags: <defaults>
</compile_context>

<pallas_src>
import functools

import jax
import jax.numpy as jnp
from jax import lax
from jax.experimental import pallas as pl
from jax.experimental.pallas import tpu as pltpu

STATE_DIM = 12
U_DIM = 4
N_FEAT = STATE_DIM + U_DIM          # 16
DELTA_T = 0.025
HOVER_THRUST = 0.483272
G = 9.81
LIFTING_DIM = 32
LANE = 128
NROW = 8                            # active derivative rows (6) padded to 8

# dot_general dims contracting both minor dims: A (m,k) x B (n,k) -> A @ B^T.
_DIMS_NT = (((1,), (1,)), ((), ()))


def _round_up(x, m):
    return ((x + m - 1) // m) * m


def _rk4_kernel(x_ref, lhsb_ref, w2_ref, o_ref):
    """One RK4 step for a (TB, 16) natural-layout batch tile.

    x_ref   : (TB, 16)   state+control block, natural (batch-major) layout.
    lhsb_ref: (8+L, 8)   stacked [shift + b2-column | W1 + b1-column].
    w2_ref  : (8, L)     output layer, rows 6..7 zero.
    o_ref   : (16, TB)   transposed output block (batch on lanes).
    """
    tb = x_ref.shape[0]

    # ---- natural -> transposed via the MXU (Q @ K^T pattern) --------------
    # xt[f, b] = x[b, f].  One tiny matmul against a 16x16 identity replaces
    # the wrapper-side HBM transpose/zero-pad pass and keeps every later op
    # lane-dense in the batch.
    eye16 = (lax.broadcasted_iota(jnp.int32, (N_FEAT, N_FEAT), 0)
             == lax.broadcasted_iota(jnp.int32, (N_FEAT, N_FEAT), 1)
             ).astype(jnp.float32)
    xt = lax.dot_general(eye16, x_ref[...], _DIMS_NT,
                         preferred_element_type=jnp.float32)      # (16, TB)

    lhsb = lhsb_ref[...]                                          # (8+L, 8)
    w2p = w2_ref[...]                                             # (8, L)

    # ---- per-tile (RK4-invariant) precompute -------------------------------
    # dx rows 6..15 are exactly zero, so the angles (rows 6..8) and the
    # thrust (row 12) are identical for all four RK4 evaluations: compute the
    # trig once per tile, on a stacked (3, TB) slab (full-lane EUP issue).
    ang = xt[6:9, :]                                   # phi, theta, psi
    s = jnp.sin(ang)
    c = jnp.cos(ang)
    sphi, stheta, spsi = s[0:1, :], s[1:2, :], s[2:3, :]
    cphi, ctheta, cpsi = c[0:1, :], c[1:2, :], c[2:3, :]
    thrust = xt[12:13, :] * (G / HOVER_THRUST)

    d3 = (sphi * spsi + stheta * cphi * cpsi) * thrust            # (1, TB)
    d4 = (sphi * cpsi - spsi * stheta * cphi) * thrust            # (1, TB)
    d5 = cphi * ctheta * thrust                                   # (1, TB)

    # Compact additive slab: rows 3..5 carry the thrust terms, all other rows
    # zero.  b1/b2 are folded into the ones-column of `lhsb`, so there is no
    # bias broadcast here (built once per tile, reused by all 4 sub-steps).
    r8 = lax.broadcasted_iota(jnp.int32, (NROW, tb), 0)
    dvec = jnp.where(r8 == 3, d3, jnp.zeros((NROW, tb), jnp.float32))
    dvec = jnp.where(r8 == 4, d4, dvec)
    dvec = jnp.where(r8 == 5, d5, dvec)

    # Working slab y0 = [state rows 0..5 ; 1 (bias row) ; 0].  Its rows 6..7
    # never change because dx rows 6..7 are exactly zero.
    y0 = jnp.where(r8 < 6, xt[0:NROW, :],
                   jnp.where(r8 == 6, 1.0, 0.0))                  # (8, TB)

    def dyn(y):
        # One stacked matmul: rows 0..7 = shift(+b2), rows 8.. = W1 y + b1.
        m = jnp.dot(lhsb, y, preferred_element_type=jnp.float32)  # (8+L, TB)
        h = jnp.tanh(m[NROW:, :])                                 # (L, TB)
        return (m[:NROW, :]
                + jnp.dot(w2p, h, preferred_element_type=jnp.float32)
                + dvec)                                           # (8, TB)

    half = DELTA_T / 2.0
    k1 = dyn(y0)
    acc = k1
    k2 = dyn(y0 + half * k1)
    acc = acc + 2.0 * k2
    k3 = dyn(y0 + half * k2)
    acc = acc + 2.0 * k3
    # NOTE: the reference PyTorch module uses k1 (not k3) here; reproduced.
    k4 = dyn(y0 + DELTA_T * k1)
    acc = acc + k4

    # acc rows 6..7 are exactly zero, so rows 6..7 of the first store pass
    # phi / theta through unchanged; rows 8..15 are copied verbatim.  Both
    # stores are 8-row aligned and lane-dense.
    o_ref[0:NROW, :] = xt[0:NROW, :] + (DELTA_T / 6.0) * acc
    o_ref[NROW:N_FEAT, :] = xt[NROW:N_FEAT, :]


@functools.partial(jax.jit, static_argnames=("tb_max",))
def quadrotor_lls_forward(x, w1, b1, w2, b2, *, tb_max=2048):
    """One RK4 step of quadrotor_LLS.forward.

    x : (bs, 16) f32 state+control, PyTorch layout.
    w1: (L, 6), b1: (L,), w2: (6, L), b2: (6,)  -- PyTorch Linear convention.
    tb_max: batch tile (multiple of 128).  VMEM is not a constraint on any
            TPU generation (per-tile working set is ~TB * 0.5 KiB); larger
            tiles amortize per-grid-step overhead.  The heuristic below also
            keeps >= 2 grid steps when the batch allows it, so
            dimension_semantics=("parallel",) can use both v7x TensorCores.
    """
    bs, n = x.shape
    assert n == N_FEAT
    lift = w1.shape[0]

    x = x.astype(jnp.float32)
    w1 = w1.astype(jnp.float32)
    b1 = b1.astype(jnp.float32).reshape(lift)
    w2 = w2.astype(jnp.float32)
    b2 = b2.astype(jnp.float32).reshape(6)

    # Stacked LHS acting on the working slab y = [state(6); 1; 0]:
    #   rows 0..7 : velocity->position shift, with b2 in the ones-column,
    #   rows 8..  : W1 with b1 in the ones-column.
    # One matmul per RK4 sub-step replaces (shift-matmul + W1-matmul + two
    # bias broadcasts) of the previous version.  Zero padding is exact, so
    # dx rows 6..7 are exactly zero.
    lhsb = jnp.zeros((NROW + lift, NROW), jnp.float32)
    lhsb = lhsb.at[0, 3].set(1.0).at[1, 4].set(1.0).at[2, 5].set(1.0)
    lhsb = lhsb.at[0:6, 6].set(b2)
    lhsb = lhsb.at[NROW:, 0:6].set(w1)
    lhsb = lhsb.at[NROW:, 6].set(b1)
    # Output layer, zero-padded to the 8 working rows.
    w2p = jnp.zeros((NROW, lift), jnp.float32).at[0:6, :].set(w2)

    # Batch tile: multiple of 128 lanes; >= 2 grid steps when possible.
    tb_max = max(LANE, (int(tb_max) // LANE) * LANE)
    tb = min(tb_max, max(LANE, _round_up(pl.cdiv(bs, 2), LANE)))

    # The kernel consumes x in its natural (bs, 16) layout: contiguous DMA,
    # no HBM transpose / zero-pad pass.  A partial last block is handled by
    # Pallas' masked stores (garbage in padded batch lanes never crosses
    # lanes and is discarded).  Only a degenerate tiny batch (bs < tb) is
    # padded so a single full block exists.
    if bs < tb:
        x_in = jnp.zeros((tb, N_FEAT), jnp.float32).at[:bs].set(x)
        pbs = tb
    else:
        x_in = x
        pbs = bs

    grid = (pl.cdiv(pbs, tb),)
    out_t = pl.pallas_call(
        _rk4_kernel,
        out_shape=jax.ShapeDtypeStruct((N_FEAT, pbs), jnp.float32),
        grid=grid,
        in_specs=[
            pl.BlockSpec((tb, N_FEAT), lambda i: (i, 0)),          # x, natural
            pl.BlockSpec((NROW + lift, NROW), lambda i: (0, 0)),   # stacked LHS
            pl.BlockSpec((NROW, lift), lambda i: (0, 0)),          # W2 padded
        ],
        out_specs=pl.BlockSpec((N_FEAT, tb), lambda i: (0, i)),
        compiler_params=pltpu.CompilerParams(
            dimension_semantics=("parallel",)),
    )(x_in, lhsb, w2p)

    # Lane-dense transposed result from the kernel; the final transpose back
    # to (bs, 16) fuses into the consumer under jit.
    return out_t[:, :bs].T


def _reference_forward(x, w1, b1, w2, b2):
    """Pure-JAX reference of the PyTorch module, for a correctness check."""
    def dyn(xx):
        thrust = (xx[:, 12:13] / HOVER_THRUST) * G
        phi, theta, psi = xx[:, 6:7], xx[:, 7:8], xx[:, 8:9]
        d3 = (jnp.sin(phi) * jnp.sin(psi)
              + jnp.sin(theta) * jnp.cos(phi) * jnp.cos(psi)) * thrust
        d4 = (jnp.sin(phi) * jnp.cos(psi)
              - jnp.sin(psi) * jnp.sin(theta) * jnp.cos(phi)) * thrust
        d5 = jnp.cos(phi) * jnp.cos(theta) * thrust
        ef = jnp.tanh(xx[:, :6] @ w1.T + b1) @ w2.T + b2
        dx6 = jnp.concatenate([xx[:, 3:6], d3, d4, d5], axis=1) + ef
        return jnp.concatenate(
            [dx6, jnp.zeros((xx.shape[0], N_FEAT - 6), xx.dtype)], axis=1)

    k1 = dyn(x)
    k2 = dyn(x + k1 * DELTA_T / 2)
    k3 = dyn(x + k2 * DELTA_T / 2)
    k4 = dyn(x + k1 * DELTA_T)   # matches the PyTorch source (k1, not k3)
    return x + DELTA_T / 6 * (k1 + 2 * k2 + 2 * k3 + k4)


if __name__ == "__main__":
    key = jax.random.PRNGKey(0)
    k_x, k_w1, k_b1, k_w2, k_b2, k_x2, k_x3 = jax.random.split(key, 7)

    L = LIFTING_DIM
    # LLS parameters in PyTorch Linear convention.
    w1 = 0.1 * jax.random.normal(k_w1, (L, 6), dtype=jnp.float32)
    b1 = 0.1 * jax.random.normal(k_b1, (L,), dtype=jnp.float32)
    w2 = 0.1 * jax.random.normal(k_w2, (6, L), dtype=jnp.float32)
    b2 = 0.1 * jax.random.normal(k_b2, (6,), dtype=jnp.float32)

    # Small batch (single padded tile).
    bs = 8
    x = jax.random.normal(k_x, (bs, N_FEAT), dtype=jnp.float32)
    out = jax.block_until_ready(quadrotor_lls_forward(x, w1, b1, w2, b2))
    ref = _reference_forward(x, w1, b1, w2, b2)
    assert out.shape == (bs, N_FEAT) and out.dtype == jnp.float32
    assert jnp.allclose(out, ref, atol=1e-4, rtol=1e-4)

    # Non-multiple batch: 2-step grid with a partial last tile, no pad copy.
    bs2 = 300
    x2 = jax.random.normal(k_x2, (bs2, N_FEAT), dtype=jnp.float32)
    out2 = jax.block_until_ready(
        quadrotor_lls_forward(x2, w1, b1, w2, b2, tb_max=256))
    ref2 = _reference_forward(x2, w1, b1, w2, b2)
    assert out2.shape == (bs2, N_FEAT)
    assert jnp.allclose(out2, ref2, atol=1e-4, rtol=1e-4)

    # Larger batch, exact tiling, default tile heuristic (>= 2 grid steps).
    bs3 = 1024
    x3 = jax.random.normal(k_x3, (bs3, N_FEAT), dtype=jnp.float32)
    out3 = jax.block_until_ready(quadrotor_lls_forward(x3, w1, b1, w2, b2))
    ref3 = _reference_forward(x3, w1, b1, w2, b2)
    assert jnp.allclose(out3, ref3, atol=1e-4, rtol=1e-4)

    print("KERNEL_OK")
</pallas_src>

<mosaic_0001>
module attributes {stable_mosaic.version = 11 : i64} {
  func.func @_rk4_kernel(%arg0: i32, %arg1: memref<128x16xf32, #tpu.memory_space<vmem>>, %arg2: memref<40x8xf32, #tpu.memory_space<vmem>>, %arg3: memref<8x32xf32, #tpu.memory_space<vmem>>, %arg4: memref<16x128xf32, #tpu.memory_space<vmem>>) attributes {dimension_semantics = [#tpu.dimension_semantics<parallel>], iteration_bounds = array<i64: 1>, scalar_prefetch = 0 : i64, scratch_operands = 0 : i64, tpu.core_type = #tpu.core_type<tc>, window_params = [{transform_indices = @transform_0, window_bounds = array<i64: 128, 16>}, {pipeline_mode = #tpu.pipeline_mode<synchronous>, transform_indices = @transform_1, window_bounds = array<i64: 40, 8>}, {pipeline_mode = #tpu.pipeline_mode<synchronous>, transform_indices = @transform_2, window_bounds = array<i64: 8, 32>}, {transform_indices = @transform_3, window_bounds = array<i64: 16, 128>}]} {
    %0 = tpu.iota {dimensions = array<i32: 0>} : vector<16x16xi32>
    %1 = tpu.iota {dimensions = array<i32: 1>} : vector<16x16xi32>
    %2 = arith.cmpi eq, %0, %1 : vector<16x16xi32>
    %3 = arith.extui %2 : vector<16x16xi1> to vector<16x16xi32>
    %4 = arith.sitofp %3 : vector<16x16xi32> to vector<16x16xf32>
    %c0 = arith.constant 0 : index
    %c0_0 = arith.constant 0 : index
    %5 = vector.load %arg1[%c0, %c0_0] : memref<128x16xf32, #tpu.memory_space<vmem>>, vector<128x16xf32>
    %cst = arith.constant dense<0.000000e+00> : vector<16x128xf32>
    %6 = tpu.matmul %4, %5, %cst {dimension_numbers = #tpu.dot_dimension_numbers<[1], [1], [0], [0], [0, 0, 1, 0], [], []>} : vector<16x16xf32>, vector<128x16xf32>, vector<16x128xf32> -> vector<16x128xf32>
    %c0_1 = arith.constant 0 : index
    %c0_2 = arith.constant 0 : index
    %7 = vector.load %arg2[%c0_1, %c0_2] : memref<40x8xf32, #tpu.memory_space<vmem>>, vector<40x8xf32>
    %c0_3 = arith.constant 0 : index
    %c0_4 = arith.constant 0 : index
    %8 = vector.load %arg3[%c0_3, %c0_4] : memref<8x32xf32, #tpu.memory_space<vmem>>, vector<8x32xf32>
    %9 = vector.extract_strided_slice %6 {offsets = [6, 0], sizes = [3, 128], strides = [1, 1]} : vector<16x128xf32> to vector<3x128xf32>
    %10 = math.sin %9 : vector<3x128xf32>
    %11 = math.cos %9 : vector<3x128xf32>
    %12 = vector.extract_strided_slice %10 {offsets = [0, 0], sizes = [1, 128], strides = [1, 1]} : vector<3x128xf32> to vector<1x128xf32>
    %13 = vector.extract_strided_slice %10 {offsets = [1, 0], sizes = [1, 128], strides = [1, 1]} : vector<3x128xf32> to vector<1x128xf32>
    %14 = vector.extract_strided_slice %10 {offsets = [2, 0], sizes = [1, 128], strides = [1, 1]} : vector<3x128xf32> to vector<1x128xf32>
    %15 = vector.extract_strided_slice %11 {offsets = [0, 0], sizes = [1, 128], strides = [1, 1]} : vector<3x128xf32> to vector<1x128xf32>
    %16 = vector.extract_strided_slice %11 {offsets = [1, 0], sizes = [1, 128], strides = [1, 1]} : vector<3x128xf32> to vector<1x128xf32>
    %17 = vector.extract_strided_slice %11 {offsets = [2, 0], sizes = [1, 128], strides = [1, 1]} : vector<3x128xf32> to vector<1x128xf32>
    %18 = vector.extract_strided_slice %6 {offsets = [12, 0], sizes = [1, 128], strides = [1, 1]} : vector<16x128xf32> to vector<1x128xf32>
    %cst_5 = arith.constant 20.2991276 : f32
    %19 = vector.broadcast %cst_5 : f32 to vector<1x128xf32>
    %20 = arith.mulf %18, %19 : vector<1x128xf32>
    %21 = arith.mulf %12, %14 : vector<1x128xf32>
    %22 = arith.mulf %13, %15 : vector<1x128xf32>
    %23 = arith.mulf %22, %17 : vector<1x128xf32>
    %24 = arith.addf %21, %23 : vector<1x128xf32>
    %25 = arith.mulf %24, %20 : vector<1x128xf32>
    %26 = arith.mulf %12, %17 : vector<1x128xf32>
    %27 = arith.mulf %14, %13 : vector<1x128xf32>
    %28 = arith.mulf %27, %15 : vector<1x128xf32>
    %29 = arith.subf %26, %28 : vector<1x128xf32>
    %30 = arith.mulf %29, %20 : vector<1x128xf32>
    %31 = arith.mulf %15, %16 : vector<1x128xf32>
    %32 = arith.mulf %31, %20 : vector<1x128xf32>
    %33 = tpu.iota {dimensions = array<i32: 0>} : vector<8x128xi32>
    %c3_i32 = arith.constant 3 : i32
    %34 = vector.broadcast %c3_i32 : i32 to vector<8x128xi32>
    %35 = arith.cmpi eq, %33, %34 : vector<8x128xi32>
    %cst_6 = arith.constant 0.000000e+00 : f32
    %36 = vector.broadcast %cst_6 : f32 to vector<8x128xf32>
    %37 = vector.shape_cast %25 : vector<1x128xf32> to vector<1x128xf32>
    %38 = vector.broadcast %37 : vector<1x128xf32> to vector<8x128xf32>
    %39 = arith.select %35, %38, %36 : vector<8x128xi1>, vector<8x128xf32>
    %c4_i32 = arith.constant 4 : i32
    %40 = vector.broadcast %c4_i32 : i32 to vector<8x128xi32>
    %41 = arith.cmpi eq, %33, %40 : vector<8x128xi32>
    %42 = vector.shape_cast %30 : vector<1x128xf32> to vector<1x128xf32>
    %43 = vector.broadcast %42 : vector<1x128xf32> to vector<8x128xf32>
    %44 = arith.select %41, %43, %39 : vector<8x128xi1>, vector<8x128xf32>
    %c5_i32 = arith.constant 5 : i32
    %45 = vector.broadcast %c5_i32 : i32 to vector<8x128xi32>
    %46 = arith.cmpi eq, %33, %45 : vector<8x128xi32>
    %47 = vector.shape_cast %32 : vector<1x128xf32> to vector<1x128xf32>
    %48 = vector.broadcast %47 : vector<1x128xf32> to vector<8x128xf32>
    %49 = arith.select %46, %48, %44 : vector<8x128xi1>, vector<8x128xf32>
    %c6_i32 = arith.constant 6 : i32
    %50 = vector.broadcast %c6_i32 : i32 to vector<8x128xi32>
    %51 = arith.cmpi slt, %33, %50 : vector<8x128xi32>
    %52 = vector.extract_strided_slice %6 {offsets = [0, 0], sizes = [8, 128], strides = [1, 1]} : vector<16x128xf32> to vector<8x128xf32>
    %c6_i32_7 = arith.constant 6 : i32
    %53 = vector.broadcast %c6_i32_7 : i32 to vector<8x128xi32>
    %54 = arith.cmpi eq, %33, %53 : vector<8x128xi32>
    %cst_8 = arith.constant 1.000000e+00 : f32
    %cst_9 = arith.constant 0.000000e+00 : f32
    %55 = vector.broadcast %cst_8 : f32 to vector<8x128xf32>
    %56 = vector.broadcast %cst_9 : f32 to vector<8x128xf32>
    %57 = arith.select %54, %55, %56 : vector<8x128xi1>, vector<8x128xf32>
    %58 = arith.select %51, %52, %57 : vector<8x128xi1>, vector<8x128xf32>
    %cst_10 = arith.constant dense<0.000000e+00> : vector<40x128xf32>
    %59 = tpu.matmul %7, %58, %cst_10 {dimension_numbers = #tpu.dot_dimension_numbers<[1], [0], [0], [1], [0, 0, 1, 1], [], []>} : vector<40x8xf32>, vector<8x128xf32>, vector<40x128xf32> -> vector<40x128xf32>
    %60 = vector.extract_strided_slice %59 {offsets = [8, 0], sizes = [32, 128], strides = [1, 1]} : vector<40x128xf32> to vector<32x128xf32>
    %61 = math.tanh %60 : vector<32x128xf32>
    %62 = vector.extract_strided_slice %59 {offsets = [0, 0], sizes = [8, 128], strides = [1, 1]} : vector<40x128xf32> to vector<8x128xf32>
    %cst_11 = arith.constant dense<0.000000e+00> : vector<8x128xf32>
    %63 = tpu.matmul %8, %61, %cst_11 {dimension_numbers = #tpu.dot_dimension_numbers<[1], [0], [0], [1], [0, 0, 1, 1], [], []>} : vector<8x32xf32>, vector<32x128xf32>, vector<8x128xf32> -> vector<8x128xf32>
    %64 = arith.addf %62, %63 : vector<8x128xf32>
    %65 = arith.addf %64, %49 : vector<8x128xf32>
    %cst_12 = arith.constant 1.250000e-02 : f32
    %66 = vector.broadcast %cst_12 : f32 to vector<8x128xf32>
    %67 = arith.mulf %66, %65 : vector<8x128xf32>
    %68 = arith.addf %58, %67 : vector<8x128xf32>
    %cst_13 = arith.constant dense<0.000000e+00> : vector<40x128xf32>
    %69 = tpu.matmul %7, %68, %cst_13 {dimension_numbers = #tpu.dot_dimension_numbers<[1], [0], [0], [1], [0, 0, 1, 1], [], []>} : vector<40x8xf32>, vector<8x128xf32>, vector<40x128xf32> -> vector<40x128xf32>
    %70 = vector.extract_strided_slice %69 {offsets = [8, 0], sizes = [32, 128], strides = [1, 1]} : vector<40x128xf32> to vector<32x128xf32>
    %71 = math.tanh %70 : vector<32x128xf32>
    %72 = vector.extract_strided_slice %69 {offsets = [0, 0], sizes = [8, 128], strides = [1, 1]} : vector<40x128xf32> to vector<8x128xf32>
    %cst_14 = arith.constant dense<0.000000e+00> : vector<8x128xf32>
    %73 = tpu.matmul %8, %71, %cst_14 {dimension_numbers = #tpu.dot_dimension_numbers<[1], [0], [0], [1], [0, 0, 1, 1], [], []>} : vector<8x32xf32>, vector<32x128xf32>, vector<8x128xf32> -> vector<8x128xf32>
    %74 = arith.addf %72, %73 : vector<8x128xf32>
    %75 = arith.addf %74, %49 : vector<8x128xf32>
    %cst_15 = arith.constant 2.000000e+00 : f32
    %76 = vector.broadcast %cst_15 : f32 to vector<8x128xf32>
    %77 = arith.mulf %76, %75 : vector<8x128xf32>
    %78 = arith.addf %65, %77 : vector<8x128xf32>
    %cst_16 = arith.constant 1.250000e-02 : f32
    %79 = vector.broadcast %cst_16 : f32 to vector<8x128xf32>
    %80 = arith.mulf %79, %75 : vector<8x128xf32>
    %81 = arith.addf %58, %80 : vector<8x128xf32>
    %cst_17 = arith.constant dense<0.000000e+00> : vector<40x128xf32>
    %82 = tpu.matmul %7, %81, %cst_17 {dimension_numbers = #tpu.dot_dimension_numbers<[1], [0], [0], [1], [0, 0, 1, 1], [], []>} : vector<40x8xf32>, vector<8x128xf32>, vector<40x128xf32> -> vector<40x128xf32>
    %83 = vector.extract_strided_slice %82 {offsets = [8, 0], sizes = [32, 128], strides = [1, 1]} : vector<40x128xf32> to vector<32x128xf32>
    %84 = math.tanh %83 : vector<32x128xf32>
    %85 = vector.extract_strided_slice %82 {offsets = [0, 0], sizes = [8, 128], strides = [1, 1]} : vector<40x128xf32> to vector<8x128xf32>
    %cst_18 = arith.constant dense<0.000000e+00> : vector<8x128xf32>
    %86 = tpu.matmul %8, %84, %cst_18 {dimension_numbers = #tpu.dot_dimension_numbers<[1], [0], [0], [1], [0, 0, 1, 1], [], []>} : vector<8x32xf32>, vector<32x128xf32>, vector<8x128xf32> -> vector<8x128xf32>
    %87 = arith.addf %85, %86 : vector<8x128xf32>
    %88 = arith.addf %87, %49 : vector<8x128xf32>
    %cst_19 = arith.constant 2.000000e+00 : f32
    %89 = vector.broadcast %cst_19 : f32 to vector<8x128xf32>
    %90 = arith.mulf %89, %88 : vector<8x128xf32>
    %91 = arith.addf %78, %90 : vector<8x128xf32>
    %cst_20 = arith.constant 2.500000e-02 : f32
    %92 = vector.broadcast %cst_20 : f32 to vector<8x128xf32>
    %93 = arith.mulf %92, %65 : vector<8x128xf32>
    %94 = arith.addf %58, %93 : vector<8x128xf32>
    %cst_21 = arith.constant dense<0.000000e+00> : vector<40x128xf32>
    %95 = tpu.matmul %7, %94, %cst_21 {dimension_numbers = #tpu.dot_dimension_numbers<[1], [0], [0], [1], [0, 0, 1, 1], [], []>} : vector<40x8xf32>, vector<8x128xf32>, vector<40x128xf32> -> vector<40x128xf32>
    %96 = vector.extract_strided_slice %95 {offsets = [8, 0], sizes = [32, 128], strides = [1, 1]} : vector<40x128xf32> to vector<32x128xf32>
    %97 = math.tanh %96 : vector<32x128xf32>
    %98 = vector.extract_strided_slice %95 {offsets = [0, 0], sizes = [8, 128], strides = [1, 1]} : vector<40x128xf32> to vector<8x128xf32>
    %cst_22 = arith.constant dense<0.000000e+00> : vector<8x128xf32>
    %99 = tpu.matmul %8, %97, %cst_22 {dimension_numbers = #tpu.dot_dimension_numbers<[1], [0], [0], [1], [0, 0, 1, 1], [], []>} : vector<8x32xf32>, vector<32x128xf32>, vector<8x128xf32> -> vector<8x128xf32>
    %100 = arith.addf %98, %99 : vector<8x128xf32>
    %101 = arith.addf %100, %49 : vector<8x128xf32>
    %102 = arith.addf %91, %101 : vector<8x128xf32>
    %103 = vector.extract_strided_slice %6 {offsets = [0, 0], sizes = [8, 128], strides = [1, 1]} : vector<16x128xf32> to vector<8x128xf32>
    %cst_23 = arith.constant 0.00416666688 : f32
    %104 = vector.broadcast %cst_23 : f32 to vector<8x128xf32>
    %105 = arith.mulf %104, %102 : vector<8x128xf32>
    %106 = arith.addf %103, %105 : vector<8x128xf32>
    %c0_24 = arith.constant 0 : index
    %c0_25 = arith.constant 0 : index
    %107 = vector.load %arg4[%c0_24, %c0_25] : memref<16x128xf32, #tpu.memory_space<vmem>>, vector<8x128xf32>
    tpu.vector_store %arg4[%c0_24, %c0_25], %106 {strides = array<i32>} : memref<16x128xf32, #tpu.memory_space<vmem>>, vector<8x128xf32>,
    %108 = vector.extract_strided_slice %6 {offsets = [8, 0], sizes = [8, 128], strides = [1, 1]} : vector<16x128xf32> to vector<8x128xf32>
    %c8 = arith.constant 8 : index
    %c0_26 = arith.constant 0 : index
    %109 = vector.load %arg4[%c8, %c0_26] : memref<16x128xf32, #tpu.memory_space<vmem>>, vector<8x128xf32>
    tpu.vector_store %arg4[%c8, %c0_26], %108 {strides = array<i32>} : memref<16x128xf32, #tpu.memory_space<vmem>>, vector<8x128xf32>,
    return
  }
  func.func @transform_0(%arg0: i32) -> (i32, i32) {
    %c0_i32 = arith.constant 0 : i32
    %c0_i32_0 = arith.constant 0 : i32
    return %arg0, %c0_i32 : i32, i32
  }
  func.func @transform_1(%arg0: i32) -> (i32, i32) {
    %c0_i32 = arith.constant 0 : i32
    %c0_i32_0 = arith.constant 0 : i32
    %c0_i32_1 = arith.constant 0 : i32
    return %c0_i32, %c0_i32_0 : i32, i32
  }
  func.func @transform_2(%arg0: i32) -> (i32, i32) {
    %c0_i32 = arith.constant 0 : i32
    %c0_i32_0 = arith.constant 0 : i32
    %c0_i32_1 = arith.constant 0 : i32
    return %c0_i32, %c0_i32_0 : i32, i32
  }
  func.func @transform_3(%arg0: i32) -> (i32, i32) {
    %c0_i32 = arith.constant 0 : i32
    %c0_i32_0 = arith.constant 0 : i32
    return %c0_i32, %arg0 : i32, i32
  }
}

</mosaic_0001>

<llo_original>
// kernel: quadrotor_lls_forward.1
$region0: #{quadrotor_lls_forward.1}
  #allocation0 [shape = 'u32[]', space=smem, size = 0x4, offset = 0x4, fixed_abs, tag = 'smem constant byte address 0x4 - core index']
  #allocation1 [shape = 'u32[144,128]{1,0:T(1,128)}', space=vmem, size = 0x12000, scoped, tag = 'internal scratch']
  %s0 = inlined_call_operand.vmem [shape: f32[128,16], index: 0, kind: input, shape index: {}]
  %s1 = inlined_call_operand.vmem [shape: f32[40,8], index: 1, kind: input, shape index: {}]
  %s2 = inlined_call_operand.vmem [shape: f32[8,32], index: 2, kind: input, shape index: {}]
  %s3 = inlined_call_operand.vmem [shape: f32[16,128], index: 3, kind: output, shape index: {}]
  %s4 = sld [smem:[#allocation0]]
  $region22: #{quadrotor_lls_forward.1} parent=0
    _
  %s6 = ssub.s32 1, %s4
  %s7 = scalar_select 0, %s6, %s4
  // Predicated region
  $region2: #{quadrotor_lls_forward.1} parent=0 // pred_check
    _
  $region3: #{quadrotor_lls_forward.1} parent=0 // pred_check_branch
    %9 = sbr.rel (0) target = $region5
  $region4: #{quadrotor_lls_forward.1} parent=0 // pred_region
    _
  $region5: #{quadrotor_lls_forward.1} parent=0 // pred_fallthru
    _
  // Predicated region
  $region6: #{quadrotor_lls_forward.1} parent=0 // pred_check
    _
  $region7: #{quadrotor_lls_forward.1} parent=0 // pred_check_branch
    %11 = sbr.rel (0) target = $region9
  $region8: #{quadrotor_lls_forward.1} parent=0 // pred_region
    _
  $region9: #{quadrotor_lls_forward.1} parent=0 // pred_fallthru
    _
  // Predicated region
  $region10: #{quadrotor_lls_forward.1} parent=0 // pred_check
    _
  $region11: #{quadrotor_lls_forward.1} parent=0 // pred_check_branch
    %13 = sbr.rel (0) target = $region13
  $region12: #{quadrotor_lls_forward.1} parent=0 // pred_region
    _
  $region13: #{quadrotor_lls_forward.1} parent=0 // pred_fallthru
    _
  %v14 = vlaneseq
  %v15 = vshrl.u32 %v14, 7
  %v16 = vadd.s32 %v15, 8
  %v17 = vlaneseq
  %v18 = vand.u32 %v17, 127
  %vm19 = vcmp.eq.s32.totalorder %v15, %v18
  %vm20 = vcmp.eq.s32.totalorder %v16, %v18
  %v21 = vsel %vm19, 1, 0
  %v22 = vsel %vm20, 1, 0
  %v23 = vcvt.s32.f32 %v21
  %v24 = vcvt.s32.f32 %v22
  %v25 = vld [vmem:[%s0] sm:$0xff]
  %v26 = vld [vmem:[%s0 + $0x8] sm:$0xff]
  %v27 = vld [vmem:[%s0 + $0x10] sm:$0xff]
  %v28 = vld [vmem:[%s0 + $0x18] sm:$0xff]
  %v29 = vld [vmem:[%s0 + $0x20] sm:$0xff]
  %v30 = vld [vmem:[%s0 + $0x28] sm:$0xff]
  %v31 = vld [vmem:[%s0 + $0x30] sm:$0xff]
  %v32 = vld [vmem:[%s0 + $0x38] sm:$0xff]
  %v33 = vld [vmem:[%s0 + $0x40] sm:$0xff]
  %v34 = vld [vmem:[%s0 + $0x48] sm:$0xff]
  %v35 = vld [vmem:[%s0 + $0x50] sm:$0xff]
  %v36 = vld [vmem:[%s0 + $0x58] sm:$0xff]
  %v37 = vld [vmem:[%s0 + $0x60] sm:$0xff]
  %v38 = vld [vmem:[%s0 + $0x68] sm:$0xff]
  %v39 = vld [vmem:[%s0 + $0x70] sm:$0xff]
  %v40 = vld [vmem:[%s0 + $0x78] sm:$0xff]
  %vm41 = vcmask 130048
  %v43 = vsel %vm41, %v23, 0
  %v46 = vsel %vm41, %v24, 0
  %v49 = vsel %vm41, %v25, 0
  %v52 = vsel %vm41, %v26, 0
  %v55 = vsel %vm41, %v27, 0
  %v58 = vsel %vm41, %v28, 0
  %v61 = vsel %vm41, %v29, 0
  %v64 = vsel %vm41, %v30, 0
  %v67 = vsel %vm41, %v31, 0
  %v70 = vsel %vm41, %v32, 0
  %v73 = vsel %vm41, %v33, 0
  %v76 = vsel %vm41, %v34, 0
  %v79 = vsel %vm41, %v35, 0
  %v82 = vsel %vm41, %v36, 0
  %v85 = vsel %vm41, %v37, 0
  %v88 = vsel %vm41, %v38, 0
  %v91 = vsel %vm41, %v39, 0
  %v94 = vsel %vm41, %v40, 0
  %96 = vmatprep.subr.mxu0 0.0
  %97 = vmatpush1.xpose.msra.mxu0 %v94
  %98 = vmatprep.subr.mxu0 0.0
  %99 = vmatpush1.xpose.msra.mxu0 %v91
  %100 = vmatprep.subr.mxu0 0.0
  %101 = vmatpush1.xpose.msra.mxu0 %v88
  %102 = vmatprep.subr.mxu0 0.0
  %103 = vmatpush1.xpose.msra.mxu0 %v85
  %104 = vmatprep.subr.mxu0 0.0
  %105 = vmatpush1.xpose.msra.mxu0 %v82
  %106 = vmatprep.subr.mxu0 0.0
  %107 = vmatpush1.xpose.msra.mxu0 %v79
  %108 = vmatprep.subr.mxu0 0.0
  %109 = vmatpush1.xpose.msra.mxu0 %v76
  %110 = vmatprep.subr.mxu0 0.0
  %111 = vmatpush1.xpose.msra.mxu0 %v73
  %112 = vmatprep.subr.mxu0 0.0
  %113 = vmatpush1.xpose.msra.mxu0 %v70
  %114 = vmatprep.subr.mxu0 0.0
  %115 = vmatpush1.xpose.msra.mxu0 %v67
  %116 = vmatprep.subr.mxu0 0.0
  %117 = vmatpush1.xpose.msra.mxu0 %v64
  %118 = vmatprep.subr.mxu0 0.0
  %119 = vmatpush1.xpose.msra.mxu0 %v61
  %120 = vmatprep.subr.mxu0 0.0
  %121 = vmatpush1.xpose.msra.mxu0 %v58
  %122 = vmatprep.subr.mxu0 0.0
  %123 = vmatpush1.xpose.msra.mxu0 %v55
  %124 = vmatprep.subr.mxu0 0.0
  %125 = vmatpush1.xpose.msra.mxu0 %v52
  %126 = vmatprep.subr.mxu0 0.0
  %127 = vmatpush1.xpose.msra.mxu0 %v49
  %128 = vmatprep.subr.mxu0 0.0
  %129 = vmatpush2.xpose.msra.mxu0 0.0
  %130 = vmatprep.subr.mxu0 0.0
  %131 = vmatpush2.xpose.msra.mxu0 0.0
  %132 = vmatprep.subr.mxu0 0.0
  %133 = vmatpush2.xpose.msra.mxu0 0.0
  %134 = vmatprep.subr.mxu0 0.0
  %135 = vmatpush2.xpose.msra.mxu0 0.0
  %136 = vmatprep.subr.mxu0 0.0
  %137 = vmatpush2.xpose.msra.mxu0 0.0
  %138 = vmatprep.subr.mxu0 0.0
  %139 = vmatpush2.xpose.msra.mxu0 0.0
  %140 = vmatprep.subr.mxu0 0.0
  %141 = vmatpush2.xpose.msra.mxu0 0.0
  %142 = vmatprep.subr.mxu0 0.0
  %143 = vmatpush2.xpose.msra.mxu0 0.0
  %144 = vmatprep.subr.mxu0 0.0
  %145 = vmatpush2.xpose.msra.mxu0 0.0
  %146 = vmatprep.subr.mxu0 0.0
  %147 = vmatpush2.xpose.msra.mxu0 0.0
  %148 = vmatprep.subr.mxu0 0.0
  %149 = vmatpush2.xpose.msra.mxu0 0.0
  %150 = vmatprep.subr.mxu0 0.0
  %151 = vmatpush2.xpose.msra.mxu0 0.0
  %152 = vmatprep.subr.mxu0 0.0
  %153 = vmatpush2.xpose.msra.mxu0 0.0
  %154 = vmatprep.subr.mxu0 0.0
  %155 = vmatpush2.xpose.msra.mxu0 0.0
  %156 = vmatprep.subr.mxu0 0.0
  %157 = vmatpush2.xpose.msra.mxu0 0.0
  %158 = vmatprep.subr.mxu0 0.0
  %159 = vmatpush2.xpose.msra.mxu0 0.0
  %160 = vmatprep.mubr.f32.mxu0 0.0
  %161 = vmatmul.mubr.f32.gmra.mxu0 %v43
  %v162 = vpop.f32.mrf.mxu0
  %v163 = vadd.f32 0.0, %v162
  %v164 = vpop.f32.mrf.mxu0
  %165 = vmatprep.mubr.f32.mxu0 0.0
  %166 = vmatmul.mubr.f32.gmra.mxu0 %v46
  %v167 = vpop.f32.mrf.mxu0
  %v168 = vadd.f32 0.0, %v167
  %v169 = vpop.f32.mrf.mxu0
  %170 = vdwg.mxu0
  %v171 = vld [vmem:[%s1] sm:$0xff]
  %v172 = vld [vmem:[%s1 + $0x8] sm:$0xff]
  %v173 = vld [vmem:[%s1 + $0x10] sm:$0xff]
  %v174 = vld [vmem:[%s1 + $0x18] sm:$0xff]
  %v175 = vld [vmem:[%s1 + $0x20] sm:$0xff]
  %v176 = vld [vmem:[%s2] sm:$0xff]
  %v177 = vand.u32 2147483647, %v163
  %vm178 = vcmp.le.f32.partialorder %v177, 0.7853982
  %vm179 = vcmp.lt.s32.totalorder %v163, 0
  %v180 = vand.u32 %v163, 2139095040
  %v181 = vshrl.u32 %v180, 23
  %v182 = vsub.s32 %v181, 127
  %v183 = vand.u32 2147483647, %v163
  %v184 = vand.u32 %v183, 8388607
  %v185 = vor.u32 %v184, 8388608
  %v186 = vsub.s32 0, %v185
  %v187 = vadd.s32 %v182, 1
  %vm188 = vcmp.gt.s32.totalorder %v187, 0
  %v189 = vsel %vm188, %v187, 0
  %v190 = vshrl.u32 %v189, 5
  %v191 = vand.u32 %v189, 31
  %v192 = vsub.s32 32, %v191
  %v193 = vshrl.u32 683565275, %v192
  %v194 = vshll.u32 683565275, %v191
  %v195 = vshrl.u32 2475754826, %v192
  %v196 = vor.u32 %v194, %v195
  %v197 = vshll.u32 2475754826, %v191
  %v198 = vshrl.u32 2131351028, %v192
  %v199 = vor.u32 %v197, %v198
  %v200 = vshll.u32 2131351028, %v191
  %v201 = vshrl.u32 2102212464, %v192
  %v202 = vor.u32 %v200, %v201
  %v203 = vshll.u32 2102212464, %v191
  %v204 = vshrl.u32 920167782, %v192
  %v205 = vor.u32 %v203, %v204
  %v206 = vshll.u32 920167782, %v191
  %v207 = vshrl.u32 1326507024, %v192
  %v208 = vor.u32 %v206, %v207
  %vm209 = vcmp.lt.s32.totalorder %v190, 1
  %vm210 = vcmp.lt.s32.totalorder %v190, 2
  %vm211 = vcmp.lt.s32.totalorder %v190, 3
  %vm212 = vcmp.lt.s32.totalorder %v190, 4
  %v213 = vsel %vm209, %v193, %v196
  %v214 = vsel %vm212, %v202, 2102212464
  %v215 = vsel %vm211, %v199, %v214
  %v216 = vsel %vm210, %v213, %v215
  %v217 = vsel %vm209, %v196, %v199
  %v218 = vsel %vm212, %v205, 920167782
  %v219 = vsel %vm211, %v202, %v218
  %v220 = vsel %vm210, %v217, %v219
  %v221 = vsel %vm209, %v199, %v202
  %v222 = vsel %vm212, %v208, 1326507024
  %v223 = vsel %vm211, %v205, %v222
  %v224 = vsel %vm210, %v221, %v223
  %v225 = vshll.u32 %v185, 8
  %v226 = vmul.u32.u64.compose %v225, %v224
  %v227 = vextract.low.u32 %v226
  %v228 = vextract.high.u32 %v226
  %v229 = vmul.u32.u64.compose %v225, %v220
  %v230 = vextract.low.u32 %v229
  %v231 = vextract.high.u32 %v229
  %v232 = vmul.u32 %v225, %v216
  %v233 = vadd.s32 %v228, %v230
  %vm234 = vc.u32 %v228, %v230
  %v235 = vadd.s32 %v231, 1
  %v236 = vsel %vm234, %v235, %v231
  %v237 = vadd.s32 %v232, %v236
  %v238 = vadd.s32 %v237, 536870912
  %v239 = vshrl.u32 %v238, 30
  %v240 = vshll.u32 %v239, 30
  %v241 = vsub.s32 %v237, %v240
  %vm242 = vcmp.lt.s32.totalorder %v241, 0
  %v243 = vsub.s32 0, %v241
  %v244 = vsel %vm242, %v243, %v241
  %v245 = vclz %v244
  %v246 = vsub.s32 %v245, 2
  %vm247 = vcmp.gt.s32.totalorder 0, %v246
  %v248 = vsel %vm247, 0, %v246
  %v249 = vsub.s32 32, %v248
  %v250 = vshll.u32 %v241, %v248
  %v251 = vshrl.u32 %v233, %v249
  %v252 = vor.u32 %v250, %v251
  %v253 = vsub.s32 4294967266, %v248
  %v254 = vadd.s32 %v253, 127
  %v255 = vshll.u32 %v254, 23
  %v256 = vor.u32 4788187, %v255
  %v257 = vand.u32 2147483647, %v256
  %v259 = vcvt.s32.f32 %v252
  %v260 = vmul.f32 %v259, %v257
  %v261 = vxor.u32 %v260, 2147483648
  %v262 = vsel %vm179, %v261, %v260
  %v263 = vsub.s32 4, %v239
  %v264 = vsel %vm179, %v263, %v239
  %v265 = vsel %vm178, %v163, %v262
  %v266 = vsel %vm178, 0, %v264
  %v267 = vcosq.f32.pop %v265
  %v268 = vsinq.f32.pop %v265
  %vm269 = vweird.f32 %v163
  %v270 = vadd.s32 %v266, 3
  %v271 = vand.u32 %v270, 3
  %vm272 = vcmp.lt.s32.totalorder %v271, 2
  %vm273 = vcmp.eq.s32.totalorder %v271, 0
  %v274 = vxor.u32 %v268, 2147483648
  %v275 = vsel %vm273, %v267, %v274
  %vm276 = vcmp.eq.s32.totalorder %v271, 2
  %v277 = vxor.u32 %v267, 2147483648
  %v278 = vsel %vm276, %v277, %v268
  %v279 = vsel %vm272, %v275, %v278
  %v280 = vsel %vm269, nan, %v279
  %v281 = vand.u32 2147483647, %v168
  %vm282 = vcmp.le.f32.partialorder %v281, 0.7853982
  %vm283 = vcmp.lt.s32.totalorder %v168, 0
  %v284 = vand.u32 %v168, 2139095040
  %v285 = vshrl.u32 %v284, 23
  %v286 = vsub.s32 %v285, 127
  %v287 = vand.u32 2147483647, %v168
  %v288 = vand.u32 %v287, 8388607
  %v289 = vor.u32 %v288, 8388608
  %v290 = vsub.s32 0, %v289
  %v291 = vadd.s32 %v286, 1
  %vm292 = vcmp.gt.s32.totalorder %v291, 0
  %v293 = vsel %vm292, %v291, 0
  %v294 = vshrl.u32 %v293, 5
  %v295 = vand.u32 %v293, 31
  %v296 = vsub.s32 32, %v295
  %v297 = vshrl.u32 683565275, %v296
  %v298 = vshll.u32 683565275, %v295
  %v299 = vshrl.u32 2475754826, %v296
  %v300 = vor.u32 %v298, %v299
  %v301 = vshll.u32 2475754826, %v295
  %v302 = vshrl.u32 2131351028, %v296
  %v303 = vor.u32 %v301, %v302
  %v304 = vshll.u32 2131351028, %v295
  %v305 = vshrl.u32 2102212464, %v296
  %v306 = vor.u32 %v304, %v305
  %v307 = vshll.u32 2102212464, %v295
  %v308 = vshrl.u32 920167782, %v296
  %v309 = vor.u32 %v307, %v308
  %v310 = vshll.u32 920167782, %v295
  %v311 = vshrl.u32 1326507024, %v296
  %v312 = vor.u32 %v310, %v311
  %vm313 = vcmp.lt.s32.totalorder %v294, 1
  %vm314 = vcmp.lt.s32.totalorder %v294, 2
  %vm315 = vcmp.lt.s32.totalorder %v294, 3
  %vm316 = vcmp.lt.s32.totalorder %v294, 4
  %v317 = vsel %vm313, %v297, %v300
  %v318 = vsel %vm316, %v306, 2102212464
  %v319 = vsel %vm315, %v303, %v318
  %v320 = vsel %vm314, %v317, %v319
  %v321 = vsel %vm313, %v300, %v303
  %v322 = vsel %vm316, %v309, 920167782
  %v323 = vsel %vm315, %v306, %v322
  %v324 = vsel %vm314, %v321, %v323
  %v325 = vsel %vm313, %v303, %v306
  %v326 = vsel %vm316, %v312, 1326507024
  %v327 = vsel %vm315, %v309, %v326
  %v328 = vsel %vm314, %v325, %v327
  %v329 = vshll.u32 %v289, 8
  %v330 = vmul.u32.u64.compose %v329, %v328
  %v331 = vextract.low.u32 %v330
  %v332 = vextract.high.u32 %v330
  %v333 = vmul.u32.u64.compose %v329, %v324
  %v334 = vextract.low.u32 %v333
  %v335 = vextract.high.u32 %v333
  %v336 = vmul.u32 %v329, %v320
  %v337 = vadd.s32 %v332, %v334
  %vm338 = vc.u32 %v332, %v334
  %v339 = vadd.s32 %v335, 1
  %v340 = vsel %vm338, %v339, %v335
  %v341 = vadd.s32 %v336, %v340
  %v342 = vadd.s32 %v341, 536870912
  %v343 = vshrl.u32 %v342, 30
  %v344 = vshll.u32 %v343, 30
  %v345 = vsub.s32 %v341, %v344
  %vm346 = vcmp.lt.s32.totalorder %v345, 0
  %v347 = vsub.s32 0, %v345
  %v348 = vsel %vm346, %v347, %v345
  %v349 = vclz %v348
  %v350 = vsub.s32 %v349, 2
  %vm351 = vcmp.gt.s32.totalorder 0, %v350
  %v352 = vsel %vm351, 0, %v350
  %v353 = vsub.s32 32, %v352
  %v354 = vshll.u32 %v345, %v352
  %v355 = vshrl.u32 %v337, %v353
  %v356 = vor.u32 %v354, %v355
  %v357 = vsub.s32 4294967266, %v352
  %v358 = vadd.s32 %v357, 127
  %v359 = vshll.u32 %v358, 23
  %v360 = vor.u32 4788187, %v359
  %v361 = vand.u32 2147483647, %v360
  %v363 = vcvt.s32.f32 %v356
  %v364 = vmul.f32 %v363, %v361
  %v365 = vxor.u32 %v364, 2147483648
  %v366 = vsel %vm283, %v365, %v364
  %v367 = vsub.s32 4, %v343
  %v368 = vsel %vm283, %v367, %v343
  %v369 = vsel %vm282, %v168, %v366
  %v370 = vsel %vm282, 0, %v368
  %v371 = vcosq.f32.pop %v369
  %v372 = vsinq.f32.pop %v369
  %vm373 = vweird.f32 %v168
  %v374 = vadd.s32 %v370, 3
  %v375 = vand.u32 %v374, 3
  %vm376 = vcmp.lt.s32.totalorder %v375, 2
  %vm377 = vcmp.eq.s32.totalorder %v375, 0
  %v378 = vxor.u32 %v372, 2147483648
  %v379 = vsel %vm377, %v371, %v378
  %vm380 = vcmp.eq.s32.totalorder %v375, 2
  %v381 = vxor.u32 %v371, 2147483648
  %v382 = vsel %vm380, %v381, %v372
  %v383 = vsel %vm376, %v379, %v382
  %v384 = vsel %vm373, nan, %v383
  %v385 = vand.u32 2147483647, %v163
  %vm386 = vcmp.le.f32.partialorder %v385, 0.7853982
  %vm387 = vcmp.lt.s32.totalorder %v163, 0
  %v388 = vand.u32 %v163, 2139095040
  %v389 = vshrl.u32 %v388, 23
  %v390 = vsub.s32 %v389, 127
  %v391 = vand.u32 2147483647, %v163
  %v392 = vand.u32 %v391, 8388607
  %v393 = vor.u32 %v392, 8388608
  %v394 = vsub.s32 0, %v393
  %v395 = vadd.s32 %v390, 1
  %vm396 = vcmp.gt.s32.totalorder %v395, 0
  %v397 = vsel %vm396, %v395, 0
  %v398 = vshrl.u32 %v397, 5
  %v399 = vand.u32 %v397, 31
  %v400 = vsub.s32 32, %v399
  %v401 = vshrl.u32 683565275, %v400
  %v402 = vshll.u32 683565275, %v399
  %v403 = vshrl.u32 2475754826, %v400
  %v404 = vor.u32 %v402, %v403
  %v405 = vshll.u32 2475754826, %v399
  %v406 = vshrl.u32 2131351028, %v400
  %v407 = vor.u32 %v405, %v406
  %v408 = vshll.u32 2131351028, %v399
  %v409 = vshrl.u32 2102212464, %v400
  %v410 = vor.u32 %v408, %v409
  %v411 = vshll.u32 2102212464, %v399
  %v412 = vshrl.u32 920167782, %v400
  %v413 = vor.u32 %v411, %v412
  %v414 = vshll.u32 920167782, %v399
  %v415 = vshrl.u32 1326507024, %v400
  %v416 = vor.u32 %v414, %v415
  %vm417 = vcmp.lt.s32.totalorder %v398, 1
  %vm418 = vcmp.lt.s32.totalorder %v398, 2
  %vm419 = vcmp.lt.s32.totalorder %v398, 3
  %vm420 = vcmp.lt.s32.totalorder %v398, 4
  %v421 = vsel %vm417, %v401, %v404
  %v422 = vsel %vm420, %v410, 2102212464
  %v423 = vsel %vm419, %v407, %v422
  %v424 = vsel %vm418, %v421, %v423
  %v425 = vsel %vm417, %v404, %v407
  %v426 = vsel %vm420, %v413, 920167782
  %v427 = vsel %vm419, %v410, %v426
  %v428 = vsel %vm418, %v425, %v427
  %v429 = vsel %vm417, %v407, %v410
  %v430 = vsel %vm420, %v416, 1326507024
  %v431 = vsel %vm419, %v413, %v430
  %v432 = vsel %vm418, %v429, %v431
  %v433 = vshll.u32 %v393, 8
  %v434 = vmul.u32.u64.compose %v433, %v432
  %v435 = vextract.low.u32 %v434
  %v436 = vextract.high.u32 %v434
  %v437 = vmul.u32.u64.compose %v433, %v428
  %v438 = vextract.low.u32 %v437
  %v439 = vextract.high.u32 %v437
  %v440 = vmul.u32 %v433, %v424
  %v441 = vadd.s32 %v436, %v438
  %vm442 = vc.u32 %v436, %v438
  %v443 = vadd.s32 %v439, 1
  %v444 = vsel %vm442, %v443, %v439
  %v445 = vadd.s32 %v440, %v444
  %v446 = vadd.s32 %v445, 536870912
  %v447 = vshrl.u32 %v446, 30
  %v448 = vshll.u32 %v447, 30
  %v449 = vsub.s32 %v445, %v448
  %vm450 = vcmp.lt.s32.totalorder %v449, 0
  %v451 = vsub.s32 0, %v449
  %v452 = vsel %vm450, %v451, %v449
  %v453 = vclz %v452
  %v454 = vsub.s32 %v453, 2
  %vm455 = vcmp.gt.s32.totalorder 0, %v454
  %v456 = vsel %vm455, 0, %v454
  %v457 = vsub.s32 32, %v456
  %v458 = vshll.u32 %v449, %v456
  %v459 = vshrl.u32 %v441, %v457
  %v460 = vor.u32 %v458, %v459
  %v461 = vsub.s32 4294967266, %v456
  %v462 = vadd.s32 %v461, 127
  %v463 = vshll.u32 %v462, 23
  %v464 = vor.u32 4788187, %v463
  %v465 = vand.u32 2147483647, %v464
  %v467 = vcvt.s32.f32 %v460
  %v468 = vmul.f32 %v467, %v465
  %v469 = vxor.u32 %v468, 2147483648
  %v470 = vsel %vm387, %v469, %v468
  %v471 = vsub.s32 4, %v447
  %v472 = vsel %vm387, %v471, %v447
  %v473 = vsel %vm386, %v163, %v470
  %v474 = vsel %vm386, 0, %v472
  %v475 = vcosq.f32.pop %v473
  %v476 = vsinq.f32.pop %v473
  %vm477 = vweird.f32 %v163
  %v478 = vand.u32 %v474, 3
  %vm479 = vcmp.lt.s32.totalorder %v478, 2
  %vm480 = vcmp.eq.s32.totalorder %v478, 0
  %v481 = vxor.u32 %v476, 2147483648
  %v482 = vsel %vm480, %v475, %v481
  %vm483 = vcmp.eq.s32.totalorder %v478, 2
  %v484 = vxor.u32 %v475, 2147483648
  %v485 = vsel %vm483, %v484, %v476
  %v486 = vsel %vm479, %v482, %v485
  %v487 = vsel %vm477, nan, %v486
  %v488 = vand.u32 2147483647, %v168
  %vm489 = vcmp.le.f32.partialorder %v488, 0.7853982
  %vm490 = vcmp.lt.s32.totalorder %v168, 0
  %v491 = vand.u32 %v168, 2139095040
  %v492 = vshrl.u32 %v491, 23
  %v493 = vsub.s32 %v492, 127
  %v494 = vand.u32 2147483647, %v168
  %v495 = vand.u32 %v494, 8388607
  %v496 = vor.u32 %v495, 8388608
  %v497 = vsub.s32 0, %v496
  %v498 = vadd.s32 %v493, 1
  %vm499 = vcmp.gt.s32.totalorder %v498, 0
  %v500 = vsel %vm499, %v498, 0
  %v501 = vshrl.u32 %v500, 5
  %v502 = vand.u32 %v500, 31
  %v503 = vsub.s32 32, %v502
  %v504 = vshrl.u32 683565275, %v503
  %v505 = vshll.u32 683565275, %v502
  %v506 = vshrl.u32 2475754826, %v503
  %v507 = vor.u32 %v505, %v506
  %v508 = vshll.u32 2475754826, %v502
  %v509 = vshrl.u32 2131351028, %v503
  %v510 = vor.u32 %v508, %v509
  %v511 = vshll.u32 2131351028, %v502
  %v512 = vshrl.u32 2102212464, %v503
  %v513 = vor.u32 %v511, %v512
  %v514 = vshll.u32 2102212464, %v502
  %v515 = vshrl.u32 920167782, %v503
  %v516 = vor.u32 %v514, %v515
  %v517 = vshll.u32 920167782, %v502
  %v518 = vshrl.u32 1326507024, %v503
  %v519 = vor.u32 %v517, %v518
  %vm520 = vcmp.lt.s32.totalorder %v501, 1
  %vm521 = vcmp.lt.s32.totalorder %v501, 2
  %vm522 = vcmp.lt.s32.totalorder %v501, 3
  %vm523 = vcmp.lt.s32.totalorder %v501, 4
  %v524 = vsel %vm520, %v504, %v507
  %v525 = vsel %vm523, %v513, 2102212464
  %v526 = vsel %vm522, %v510, %v525
  %v527 = vsel %vm521, %v524, %v526
  %v528 = vsel %vm520, %v507, %v510
  %v529 = vsel %vm523, %v516, 920167782
  %v530 = vsel %vm522, %v513, %v529
  %v531 = vsel %vm521, %v528, %v530
  %v532 = vsel %vm520, %v510, %v513
  %v533 = vsel %vm523, %v519, 1326507024
  %v534 = vsel %vm522, %v516, %v533
  %v535 = vsel %vm521, %v532, %v534
  %v536 = vshll.u32 %v496, 8
  %v537 = vmul.u32.u64.compose %v536, %v535
  %v538 = vextract.low.u32 %v537
  %v539 = vextract.high.u32 %v537
  %v540 = vmul.u32.u64.compose %v536, %v531
  %v541 = vextract.low.u32 %v540
  %v542 = vextract.high.u32 %v540
  %v543 = vmul.u32 %v536, %v527
  %v544 = vadd.s32 %v539, %v541
  %vm545 = vc.u32 %v539, %v541
  %v546 = vadd.s32 %v542, 1
  %v547 = vsel %vm545, %v546, %v542
  %v548 = vadd.s32 %v543, %v547
  %v549 = vadd.s32 %v548, 536870912
  %v550 = vshrl.u32 %v549, 30
  %v551 = vshll.u32 %v550, 30
  %v552 = vsub.s32 %v548, %v551
  %vm553 = vcmp.lt.s32.totalorder %v552, 0
  %v554 = vsub.s32 0, %v552
  %v555 = vsel %vm553, %v554, %v552
  %v556 = vclz %v555
  %v557 = vsub.s32 %v556, 2
  %vm558 = vcmp.gt.s32.totalorder 0, %v557
  %v559 = vsel %vm558, 0, %v557
  %v560 = vsub.s32 32, %v559
  %v561 = vshll.u32 %v552, %v559
  %v562 = vshrl.u32 %v544, %v560
  %v563 = vor.u32 %v561, %v562
  %v564 = vsub.s32 4294967266, %v559
  %v565 = vadd.s32 %v564, 127
  %v566 = vshll.u32 %v565, 23
  %v567 = vor.u32 4788187, %v566
  %v568 = vand.u32 2147483647, %v567
  %v570 = vcvt.s32.f32 %v563
  %v571 = vmul.f32 %v570, %v568
  %v572 = vxor.u32 %v571, 2147483648
  %v573 = vsel %vm490, %v572, %v571
  %v574 = vsub.s32 4, %v550
  %v575 = vsel %vm490, %v574, %v550
  %v576 = vsel %vm489, %v168, %v573
  %v577 = vsel %vm489, 0, %v575
  %v578 = vcosq.f32.pop %v576
  %v579 = vsinq.f32.pop %v576
  %vm580 = vweird.f32 %v168
  %v581 = vand.u32 %v577, 3
  %vm582 = vcmp.lt.s32.totalorder %v581, 2
  %vm583 = vcmp.eq.s32.totalorder %v581, 0
  %v584 = vxor.u32 %v579, 2147483648
  %v585 = vsel %vm583, %v578, %v584
  %vm586 = vcmp.eq.s32.totalorder %v581, 2
  %v587 = vxor.u32 %v578, 2147483648
  %v588 = vsel %vm586, %v587, %v579
  %v589 = vsel %vm582, %v585, %v588
  %v590 = vsel %vm580, nan, %v589
  %v591 = vmul.f32 %v168, 20.299128
  %v593 = vrot.slane %v384, 2
  %v595 = vmul.f32 %v280, %v593
  %v597 = vrot.slane %v487, 7
  %v599 = vmul.f32 %v280, %v597
  %v601 = vrot.slane %v590, 1
  %v603 = vmul.f32 %v599, %v601
  %v605 = vrot.slane %v603, 1
  %v607 = vadd.f32 %v595, %v605
  %v609 = vrot.slane %v591, 6
  %v611 = vmul.f32 %v607, %v609
  %v612 = vrot.slane %v590, 2
  %v614 = vmul.f32 %v280, %v612
  %v616 = vrot.slane %v280, 7
  %v618 = vmul.f32 %v384, %v616
  %v619 = vrot.slane %v487, 6
  %v621 = vmul.f32 %v618, %v619
  %v623 = vrot.slane %v621, 2
  %v625 = vsub.f32 %v614, %v623
  %v626 = vmul.f32 %v625, %v609
  %v627 = vrot.slane %v487, 1
  %v629 = vmul.f32 %v487, %v627
  %v630 = vmul.f32 %v629, %v609
  %vm631 = vcmp.eq.s32.totalorder %v15, 3
  %v632 = vlaneseq
  %v633 = vshrl.u32 %v632, 7
  %v634 = vsub.s32 6, %v633
  %v635 = vrot.slane %v611, %v634
  %v636 = vsel %vm631, %v635, 0.0
  %vm637 = vcmp.eq.s32.totalorder %v15, 4
  %v638 = vlaneseq
  %v639 = vshrl.u32 %v638, 7
  %v640 = vsub.s32 6, %v639
  %v641 = vrot.slane %v626, %v640
  %v642 = vsel %vm637, %v641, %v636
  %vm643 = vcmp.eq.s32.totalorder %v15, 5
  %v644 = vlaneseq
  %v645 = vshrl.u32 %v644, 7
  %v646 = vsub.s32 6, %v645
  %v647 = vrot.slane %v630, %v646
  %v648 = vsel %vm643, %v647, %v642
  %vm649 = vcmp.lt.s32.totalorder %v15, 6
  %vm650 = vcmp.eq.s32.totalorder %v15, 6
  %v651 = vsel %vm650, 1.0, 0.0
  %v652 = vsel %vm649, %v163, %v651
  %vm653 = vcmask 64512
  %v655 = vsel %vm653, %v171, 0
  %v658 = vsel %vm653, %v172, 0
  %v661 = vsel %vm653, %v173, 0
  %v664 = vsel %vm653, %v174, 0
  %v667 = vsel %vm653, %v175, 0
  %669 = vmatprep.subr.mxu0 0.0
  %670 = vmatpush1.msra.mxu0 0.0
  %671 = vmatprep.subr.mxu0 0.0
  %672 = vmatpush1.msra.mxu0 0.0
  %673 = vmatprep.subr.mxu0 0.0
  %674 = vmatpush1.msra.mxu0 0.0
  %675 = vmatprep.subr.mxu0 0.0
  %676 = vmatpush1.msra.mxu0 0.0
  %677 = vmatprep.subr.mxu0 0.0
  %678 = vmatpush1.msra.mxu0 0.0
  %679 = vmatprep.subr.mxu0 0.0
  %680 = vmatpush1.msra.mxu0 0.0
  %681 = vmatprep.subr.mxu0 0.0
  %682 = vmatpush1.msra.mxu0 0.0
  %683 = vmatprep.subr.mxu0 0.0
  %684 = vmatpush1.msra.mxu0 0.0
  %685 = vmatprep.subr.mxu0 0.0
  %686 = vmatpush1.msra.mxu0 0.0
  %687 = vmatprep.subr.mxu0 0.0
  %688 = vmatpush1.msra.mxu0 0.0
  %689 = vmatprep.subr.mxu0 0.0
  %690 = vmatpush1.msra.mxu0 0.0
  %691 = vmatprep.subr.mxu0 0.0
  %692 = vmatpush1.msra.mxu0 0.0
  %693 = vmatprep.subr.mxu0 0.0
  %694 = vmatpush1.msra.mxu0 0.0
  %695 = vmatprep.subr.mxu0 0.0
  %696 = vmatpush1.msra.mxu0 0.0
  %697 = vmatprep.subr.mxu0 0.0
  %698 = vmatpush1.msra.mxu0 0.0
  %699 = vmatprep.subr.mxu0 0.0
  %700 = vmatpush1.msra.mxu0 %v652
  %701 = vmatprep.subr.mxu0 0.0
  %702 = vmatpush2.msra.mxu0 0.0
  %703 = vmatprep.subr.mxu0 0.0
  %704 = vmatpush2.msra.mxu0 0.0
  %705 = vmatprep.subr.mxu0 0.0
  %706 = vmatpush2.msra.mxu0 0.0
  %707 = vmatprep.subr.mxu0 0.0
  %708 = vmatpush2.msra.mxu0 0.0
  %709 = vmatprep.subr.mxu0 0.0
  %710 = vmatpush2.msra.mxu0 0.0
  %711 = vmatprep.subr.mxu0 0.0
  %712 = vmatpush2.msra.mxu0 0.0
  %713 = vmatprep.subr.mxu0 0.0
  %714 = vmatpush2.msra.mxu0 0.0
  %715 = vmatprep.subr.mxu0 0.0
  %716 = vmatpush2.msra.mxu0 0.0
  %717 = vmatprep.subr.mxu0 0.0
  %718 = vmatpush2.msra.mxu0 0.0
  %719 = vmatprep.subr.mxu0 0.0
  %720 = vmatpush2.msra.mxu0 0.0
  %721 = vmatprep.subr.mxu0 0.0
  %722 = vmatpush2.msra.mxu0 0.0
  %723 = vmatprep.subr.mxu0 0.0
  %724 = vmatpush2.msra.mxu0 0.0
  %725 = vmatprep.subr.mxu0 0.0
  %726 = vmatpush2.msra.mxu0 0.0
  %727 = vmatprep.subr.mxu0 0.0
  %728 = vmatpush2.msra.mxu0 0.0
  %729 = vmatprep.subr.mxu0 0.0
  %730 = vmatpush2.msra.mxu0 0.0
  %731 = vmatprep.subr.mxu0 0.0
  %732 = vmatpush2.msra.mxu0 0.0
  %733 = vmatprep.mubr.f32.mxu0 0.0
  %734 = vmatmul.mubr.f32.gmra.mxu0 %v655
  %v735 = vpop.f32.mrf.mxu0
  %v736 = vadd.f32 0.0, %v735
  %v737 = vpop.f32.mrf.mxu0
  %738 = vmatprep.mubr.f32.mxu0 0.0
  %739 = vmatmul.mubr.f32.gmra.mxu0 %v658
  %v740 = vpop.f32.mrf.mxu0
  %v741 = vadd.f32 0.0, %v740
  %v742 = vpop.f32.mrf.mxu0
  %743 = vmatprep.mubr.f32.mxu0 0.0
  %744 = vmatmul.mubr.f32.gmra.mxu0 %v661
  %v745 = vpop.f32.mrf.mxu0
  %v746 = vadd.f32 0.0, %v745
  %v747 = vpop.f32.mrf.mxu0
  %748 = vmatprep.mubr.f32.mxu0 0.0
  %749 = vmatmul.mubr.f32.gmra.mxu0 %v664
  %v750 = vpop.f32.mrf.mxu0
  %v751 = vadd.f32 0.0, %v750
  %v752 = vpop.f32.mrf.mxu0
  %753 = vmatprep.mubr.f32.mxu0 0.0
  %754 = vmatmul.mubr.f32.gmra.mxu0 %v667
  %v755 = vpop.f32.mrf.mxu0
  %v756 = vadd.f32 0.0, %v755
  %v757 = vpop.f32.mrf.mxu0
  %758 = vdwg.mxu0
  %v759 = vtanh.pop %v741
  %v760 = vtanh.pop %v746
  %v761 = vtanh.pop %v751
  %v762 = vtanh.pop %v756
  %vm763 = vcmask 261120
  %v765 = vsel %vm763, %v176, 0
  %767 = vmatprep.subr.mxu0 0.0
  %768 = vmatpush1.msra.mxu0 0.0
  %769 = vmatprep.subr.mxu0 0.0
  %770 = vmatpush1.msra.mxu0 0.0
  %771 = vmatprep.subr.mxu0 0.0
  %772 = vmatpush1.msra.mxu0 0.0
  %773 = vmatprep.subr.mxu0 0.0
  %774 = vmatpush1.msra.mxu0 0.0
  %775 = vmatprep.subr.mxu0 0.0
  %776 = vmatpush1.msra.mxu0 0.0
  %777 = vmatprep.subr.mxu0 0.0
  %778 = vmatpush1.msra.mxu0 0.0
  %779 = vmatprep.subr.mxu0 0.0
  %780 = vmatpush1.msra.mxu0 0.0
  %781 = vmatprep.subr.mxu0 0.0
  %782 = vmatpush1.msra.mxu0 0.0
  %783 = vmatprep.subr.mxu0 0.0
  %784 = vmatpush1.msra.mxu0 0.0
  %785 = vmatprep.subr.mxu0 0.0
  %786 = vmatpush1.msra.mxu0 0.0
  %787 = vmatprep.subr.mxu0 0.0
  %788 = vmatpush1.msra.mxu0 0.0
  %789 = vmatprep.subr.mxu0 0.0
  %790 = vmatpush1.msra.mxu0 0.0
  %791 = vmatprep.subr.mxu0 0.0
  %792 = vmatpush1.msra.mxu0 %v762
  %793 = vmatprep.subr.mxu0 0.0
  %794 = vmatpush1.msra.mxu0 %v761
  %795 = vmatprep.subr.mxu0 0.0
  %796 = vmatpush1.msra.mxu0 %v760
  %797 = vmatprep.subr.mxu0 0.0
  %798 = vmatpush1.msra.mxu0 %v759
  %799 = vmatprep.subr.mxu0 0.0
  %800 = vmatpush2.msra.mxu0 0.0
  %801 = vmatprep.subr.mxu0 0.0
  %802 = vmatpush2.msra.mxu0 0.0
  %803 = vmatprep.subr.mxu0 0.0
  %804 = vmatpush2.msra.mxu0 0.0
  %805 = vmatprep.subr.mxu0 0.0
  %806 = vmatpush2.msra.mxu0 0.0
  %807 = vmatprep.subr.mxu0 0.0
  %808 = vmatpush2.msra.mxu0 0.0
  %809 = vmatprep.subr.mxu0 0.0
  %810 = vmatpush2.msra.mxu0 0.0
  %811 = vmatprep.subr.mxu0 0.0
  %812 = vmatpush2.msra.mxu0 0.0
  %813 = vmatprep.subr.mxu0 0.0
  %814 = vmatpush2.msra.mxu0 0.0
  %815 = vmatprep.subr.mxu0 0.0
  %816 = vmatpush2.msra.mxu0 0.0
  %817 = vmatprep.subr.mxu0 0.0
  %818 = vmatpush2.msra.mxu0 0.0
  %819 = vmatprep.subr.mxu0 0.0
  %820 = vmatpush2.msra.mxu0 0.0
  %821 = vmatprep.subr.mxu0 0.0
  %822 = vmatpush2.msra.mxu0 0.0
  %823 = vmatprep.subr.mxu0 0.0
  %824 = vmatpush2.msra.mxu0 0.0
  %825 = vmatprep.subr.mxu0 0.0
  %826 = vmatpush2.msra.mxu0 0.0
  %827 = vmatprep.subr.mxu0 0.0
  %828 = vmatpush2.msra.mxu0 0.0
  %829 = vmatprep.subr.mxu0 0.0
  %830 = vmatpush2.msra.mxu0 0.0
  %831 = vmatprep.mubr.f32.mxu0 0.0
  %832 = vmatmul.mubr.f32.gmra.mxu0 %v765
  %v833 = vpop.f32.mrf.mxu0
  %v834 = vadd.f32 0.0, %v833
  %v835 = vpop.f32.mrf.mxu0
  %836 = vdwg.mxu0
  %v837 = vadd.f32 %v736, %v834
  %v838 = vadd.f32 %v837, %v648
  %v839 = vmul.f32 %v838, 0.0125
  %v840 = vadd.f32 %v652, %v839
  %841 = vmatprep.subr.mxu0 0.0
  %842 = vmatpush1.msra.mxu0 0.0
  %843 = vmatprep.subr.mxu0 0.0
  %844 = vmatpush1.msra.mxu0 0.0
  %845 = vmatprep.subr.mxu0 0.0
  %846 = vmatpush1.msra.mxu0 0.0
  %847 = vmatprep.subr.mxu0 0.0
  %848 = vmatpush1.msra.mxu0 0.0
  %849 = vmatprep.subr.mxu0 0.0
  %850 = vmatpush1.msra.mxu0 0.0
  %851 = vmatprep.subr.mxu0 0.0
  %852 = vmatpush1.msra.mxu0 0.0
  %853 = vmatprep.subr.mxu0 0.0
  %854 = vmatpush1.msra.mxu0 0.0
  %855 = vmatprep.subr.mxu0 0.0
  %856 = vmatpush1.msra.mxu0 0.0
  %857 = vmatprep.subr.mxu0 0.0
  %858 = vmatpush1.msra.mxu0 0.0
  %859 = vmatprep.subr.mxu0 0.0
  %860 = vmatpush1.msra.mxu0 0.0
  %861 = vmatprep.subr.mxu0 0.0
  %862 = vmatpush1.msra.mxu0 0.0
  %863 = vmatprep.subr.mxu0 0.0
  %864 = vmatpush1.msra.mxu0 0.0
  %865 = vmatprep.subr.mxu0 0.0
  %866 = vmatpush1.msra.mxu0 0.0
  %867 = vmatprep.subr.mxu0 0.0
  %868 = vmatpush1.msra.mxu0 0.0
  %869 = vmatprep.subr.mxu0 0.0
  %870 = vmatpush1.msra.mxu0 0.0
  %871 = vmatprep.subr.mxu0 0.0
  %872 = vmatpush1.msra.mxu0 %v840
  %873 = vmatprep.subr.mxu0 0.0
  %874 = vmatpush2.msra.mxu0 0.0
  %875 = vmatprep.subr.mxu0 0.0
  %876 = vmatpush2.msra.mxu0 0.0
  %877 = vmatprep.subr.mxu0 0.0
  %878 = vmatpush2.msra.mxu0 0.0
  %879 = vmatprep.subr.mxu0 0.0
  %880 = vmatpush2.msra.mxu0 0.0
  %881 = vmatprep.subr.mxu0 0.0
  %882 = vmatpush2.msra.mxu0 0.0
  %883 = vmatprep.subr.mxu0 0.0
  %884 = vmatpush2.msra.mxu0 0.0
  %885 = vmatprep.subr.mxu0 0.0
  %886 = vmatpush2.msra.mxu0 0.0
  %887 = vmatprep.subr.mxu0 0.0
  %888 = vmatpush2.msra.mxu0 0.0
  %889 = vmatprep.subr.mxu0 0.0
  %890 = vmatpush2.msra.mxu0 0.0
  %891 = vmatprep.subr.mxu0 0.0
  %892 = vmatpush2.msra.mxu0 0.0
  %893 = vmatprep.subr.mxu0 0.0
  %894 = vmatpush2.msra.mxu0 0.0
  %895 = vmatprep.subr.mxu0 0.0
  %896 = vmatpush2.msra.mxu0 0.0
  %897 = vmatprep.subr.mxu0 0.0
  %898 = vmatpush2.msra.mxu0 0.0
  %899 = vmatprep.subr.mxu0 0.0
  %900 = vmatpush2.msra.mxu0 0.0
  %901 = vmatprep.subr.mxu0 0.0
  %902 = vmatpush2.msra.mxu0 0.0
  %903 = vmatprep.subr.mxu0 0.0
  %904 = vmatpush2.msra.mxu0 0.0
  %905 = vmatprep.mubr.f32.mxu0 0.0
  %906 = vmatmul.mubr.f32.gmra.mxu0 %v655
  %v907 = vpop.f32.mrf.mxu0
  %v908 = vadd.f32 0.0, %v907
  %v909 = vpop.f32.mrf.mxu0
  %910 = vmatprep.mubr.f32.mxu0 0.0
  %911 = vmatmul.mubr.f32.gmra.mxu0 %v658
  %v912 = vpop.f32.mrf.mxu0
  %v913 = vadd.f32 0.0, %v912
  %v914 = vpop.f32.mrf.mxu0
  %915 = vmatprep.mubr.f32.mxu0 0.0
  %916 = vmatmul.mubr.f32.gmra.mxu0 %v661
  %v917 = vpop.f32.mrf.mxu0
  %v918 = vadd.f32 0.0, %v917
  %v919 = vpop.f32.mrf.mxu0
  %920 = vmatprep.mubr.f32.mxu0 0.0
  %921 = vmatmul.mubr.f32.gmra.mxu0 %v664
  %v922 = vpop.f32.mrf.mxu0
  %v923 = vadd.f32 0.0, %v922
  %v924 = vpop.f32.mrf.mxu0
  %925 = vmatprep.mubr.f32.mxu0 0.0
  %926 = vmatmul.mubr.f32.gmra.mxu0 %v667
  %v927 = vpop.f32.mrf.mxu0
  %v928 = vadd.f32 0.0, %v927
  %v929 = vpop.f32.mrf.mxu0
  %930 = vdwg.mxu0
  %v931 = vtanh.pop %v913
  %v932 = vtanh.pop %v918
  %v933 = vtanh.pop %v923
  %v934 = vtanh.pop %v928
  %935 = vmatprep.subr.mxu0 0.0
  %936 = vmatpush1.msra.mxu0 0.0
  %937 = vmatprep.subr.mxu0 0.0
  %938 = vmatpush1.msra.mxu0 0.0
  %939 = vmatprep.subr.mxu0 0.0
  %940 = vmatpush1.msra.mxu0 0.0
  %941 = vmatprep.subr.mxu0 0.0
  %942 = vmatpush1.msra.mxu0 0.0
  %943 = vmatprep.subr.mxu0 0.0
  %944 = vmatpush1.msra.mxu0 0.0
  %945 = vmatprep.subr.mxu0 0.0
  %946 = vmatpush1.msra.mxu0 0.0
  %947 = vmatprep.subr.mxu0 0.0
  %948 = vmatpush1.msra.mxu0 0.0
  %949 = vmatprep.subr.mxu0 0.0
  %950 = vmatpush1.msra.mxu0 0.0
  %951 = vmatprep.subr.mxu0 0.0
  %952 = vmatpush1.msra.mxu0 0.0
  %953 = vmatprep.subr.mxu0 0.0
  %954 = vmatpush1.msra.mxu0 0.0
  %955 = vmatprep.subr.mxu0 0.0
  %956 = vmatpush1.msra.mxu0 0.0
  %957 = vmatprep.subr.mxu0 0.0
  %958 = vmatpush1.msra.mxu0 0.0
  %959 = vmatprep.subr.mxu0 0.0
  %960 = vmatpush1.msra.mxu0 %v934
  %961 = vmatprep.subr.mxu0 0.0
  %962 = vmatpush1.msra.mxu0 %v933
  %963 = vmatprep.subr.mxu0 0.0
  %964 = vmatpush1.msra.mxu0 %v932
  %965 = vmatprep.subr.mxu0 0.0
  %966 = vmatpush1.msra.mxu0 %v931
  %967 = vmatprep.subr.mxu0 0.0
  %968 = vmatpush2.msra.mxu0 0.0
  %969 = vmatprep.subr.mxu0 0.0
  %970 = vmatpush2.msra.mxu0 0.0
  %971 = vmatprep.subr.mxu0 0.0
  %972 = vmatpush2.msra.mxu0 0.0
  %973 = vmatprep.subr.mxu0 0.0
  %974 = vmatpush2.msra.mxu0 0.0
  %975 = vmatprep.subr.mxu0 0.0
  %976 = vmatpush2.msra.mxu0 0.0
  %977 = vmatprep.subr.mxu0 0.0
  %978 = vmatpush2.msra.mxu0 0.0
  %979 = vmatprep.subr.mxu0 0.0
  %980 = vmatpush2.msra.mxu0 0.0
  %981 = vmatprep.subr.mxu0 0.0
  %982 = vmatpush2.msra.mxu0 0.0
  %983 = vmatprep.subr.mxu0 0.0
  %984 = vmatpush2.msra.mxu0 0.0
  %985 = vmatprep.subr.mxu0 0.0
  %986 = vmatpush2.msra.mxu0 0.0
  %987 = vmatprep.subr.mxu0 0.0
  %988 = vmatpush2.msra.mxu0 0.0
  %989 = vmatprep.subr.mxu0 0.0
  %990 = vmatpush2.msra.mxu0 0.0
  %991 = vmatprep.subr.mxu0 0.0
  %992 = vmatpush2.msra.mxu0 0.0
  %993 = vmatprep.subr.mxu0 0.0
  %994 = vmatpush2.msra.mxu0 0.0
  %995 = vmatprep.subr.mxu0 0.0
  %996 = vmatpush2.msra.mxu0 0.0
  %997 = vmatprep.subr.mxu0 0.0
  %998 = vmatpush2.msra.mxu0 0.0
  %999 = vmatprep.mubr.f32.mxu0 0.0
  %1000 = vmatmul.mubr.f32.gmra.mxu0 %v765
  %v1001 = vpop.f32.mrf.mxu0
  %v1002 = vadd.f32 0.0, %v1001
  %v1003 = vpop.f32.mrf.mxu0
  %1004 = vdwg.mxu0
  %v1005 = vadd.f32 %v908, %v1002
  %v1006 = vadd.f32 %v1005, %v648
  %v1007 = vmul.f32 %v1006, 2.0
  %v1008 = vadd.f32 %v838, %v1007
  %v1009 = vmul.f32 %v1006, 0.0125
  %v1010 = vadd.f32 %v652, %v1009
  %1011 = vmatprep.subr.mxu0 0.0
  %1012 = vmatpush1.msra.mxu0 0.0
  %1013 = vmatprep.subr.mxu0 0.0
  %1014 = vmatpush1.msra.mxu0 0.0
  %1015 = vmatprep.subr.mxu0 0.0
  %1016 = vmatpush1.msra.mxu0 0.0
  %1017 = vmatprep.subr.mxu0 0.0
  %1018 = vmatpush1.msra.mxu0 0.0
  %1019 = vmatprep.subr.mxu0 0.0
  %1020 = vmatpush1.msra.mxu0 0.0
  %1021 = vmatprep.subr.mxu0 0.0
  %1022 = vmatpush1.msra.mxu0 0.0
  %1023 = vmatprep.subr.mxu0 0.0
  %1024 = vmatpush1.msra.mxu0 0.0
  %1025 = vmatprep.subr.mxu0 0.0
  %1026 = vmatpush1.msra.mxu0 0.0
  %1027 = vmatprep.subr.mxu0 0.0
  %1028 = vmatpush1.msra.mxu0 0.0
  %1029 = vmatprep.subr.mxu0 0.0
  %1030 = vmatpush1.msra.mxu0 0.0
  %1031 = vmatprep.subr.mxu0 0.0
  %1032 = vmatpush1.msra.mxu0 0.0
  %1033 = vmatprep.subr.mxu0 0.0
  %1034 = vmatpush1.msra.mxu0 0.0
  %1035 = vmatprep.subr.mxu0 0.0
  %1036 = vmatpush1.msra.mxu0 0.0
  %1037 = vmatprep.subr.mxu0 0.0
  %1038 = vmatpush1.msra.mxu0 0.0
  %1039 = vmatprep.subr.mxu0 0.0
  %1040 = vmatpush1.msra.mxu0 0.0
  %1041 = vmatprep.subr.mxu0 0.0
  %1042 = vmatpush1.msra.mxu0 %v1010
  %1043 = vmatprep.subr.mxu0 0.0
  %1044 = vmatpush2.msra.mxu0 0.0
  %1045 = vmatprep.subr.mxu0 0.0
  %1046 = vmatpush2.msra.mxu0 0.0
  %1047 = vmatprep.subr.mxu0 0.0
  %1048 = vmatpush2.msra.mxu0 0.0
  %1049 = vmatprep.subr.mxu0 0.0
  %1050 = vmatpush2.msra.mxu0 0.0
  %1051 = vmatprep.subr.mxu0 0.0
  %1052 = vmatpush2.msra.mxu0 0.0
  %1053 = vmatprep.subr.mxu0 0.0
  %1054 = vmatpush2.msra.mxu0 0.0
  %1055 = vmatprep.subr.mxu0 0.0
  %1056 = vmatpush2.msra.mxu0 0.0
  %1057 = vmatprep.subr.mxu0 0.0
  %1058 = vmatpush2.msra.mxu0 0.0
  %1059 = vmatprep.subr.mxu0 0.0
  %1060 = vmatpush2.msra.mxu0 0.0
  %1061 = vmatprep.subr.mxu0 0.0
  %1062 = vmatpush2.msra.mxu0 0.0
  %1063 = vmatprep.subr.mxu0 0.0
  %1064 = vmatpush2.msra.mxu0 0.0
  %1065 = vmatprep.subr.mxu0 0.0
  %1066 = vmatpush2.msra.mxu0 0.0
  %1067 = vmatprep.subr.mxu0 0.0
  %1068 = vmatpush2.msra.mxu0 0.0
  %1069 = vmatprep.subr.mxu0 0.0
  %1070 = vmatpush2.msra.mxu0 0.0
  %1071 = vmatprep.subr.mxu0 0.0
  %1072 = vmatpush2.msra.mxu0 0.0
  %1073 = vmatprep.subr.mxu0 0.0
  %1074 = vmatpush2.msra.mxu0 0.0
  %1075 = vmatprep.mubr.f32.mxu0 0.0
  %1076 = vmatmul.mubr.f32.gmra.mxu0 %v655
  %v1077 = vpop.f32.mrf.mxu0
  %v1078 = vadd.f32 0.0, %v1077
  %v1079 = vpop.f32.mrf.mxu0
  %1080 = vmatprep.mubr.f32.mxu0 0.0
  %1081 = vmatmul.mubr.f32.gmra.mxu0 %v658
  %v1082 = vpop.f32.mrf.mxu0
  %v1083 = vadd.f32 0.0, %v1082
  %v1084 = vpop.f32.mrf.mxu0
  %1085 = vmatprep.mubr.f32.mxu0 0.0
  %1086 = vmatmul.mubr.f32.gmra.mxu0 %v661
  %v1087 = vpop.f32.mrf.mxu0
  %v1088 = vadd.f32 0.0, %v1087
  %v1089 = vpop.f32.mrf.mxu0
  %1090 = vmatprep.mubr.f32.mxu0 0.0
  %1091 = vmatmul.mubr.f32.gmra.mxu0 %v664
  %v1092 = vpop.f32.mrf.mxu0
  %v1093 = vadd.f32 0.0, %v1092
  %v1094 = vpop.f32.mrf.mxu0
  %1095 = vmatprep.mubr.f32.mxu0 0.0
  %1096 = vmatmul.mubr.f32.gmra.mxu0 %v667
  %v1097 = vpop.f32.mrf.mxu0
  %v1098 = vadd.f32 0.0, %v1097
  %v1099 = vpop.f32.mrf.mxu0
  %1100 = vdwg.mxu0
  %v1101 = vtanh.pop %v1083
  %v1102 = vtanh.pop %v1088
  %v1103 = vtanh.pop %v1093
  %v1104 = vtanh.pop %v1098
  %1105 = vmatprep.subr.mxu0 0.0
  %1106 = vmatpush1.msra.mxu0 0.0
  %1107 = vmatprep.subr.mxu0 0.0
  %1108 = vmatpush1.msra.mxu0 0.0
  %1109 = vmatprep.subr.mxu0 0.0
  %1110 = vmatpush1.msra.mxu0 0.0
  %1111 = vmatprep.subr.mxu0 0.0
  %1112 = vmatpush1.msra.mxu0 0.0
  %1113 = vmatprep.subr.mxu0 0.0
  %1114 = vmatpush1.msra.mxu0 0.0
  %1115 = vmatprep.subr.mxu0 0.0
  %1116 = vmatpush1.msra.mxu0 0.0
  %1117 = vmatprep.subr.mxu0 0.0
  %1118 = vmatpush1.msra.mxu0 0.0
  %1119 = vmatprep.subr.mxu0 0.0
  %1120 = vmatpush1.msra.mxu0 0.0
  %1121 = vmatprep.subr.mxu0 0.0
  %1122 = vmatpush1.msra.mxu0 0.0
  %1123 = vmatprep.subr.mxu0 0.0
  %1124 = vmatpush1.msra.mxu0 0.0
  %1125 = vmatprep.subr.mxu0 0.0
  %1126 = vmatpush1.msra.mxu0 0.0
  %1127 = vmatprep.subr.mxu0 0.0
  %1128 = vmatpush1.msra.mxu0 0.0
  %1129 = vmatprep.subr.mxu0 0.0
  %1130 = vmatpush1.msra.mxu0 %v1104
  %1131 = vmatprep.subr.mxu0 0.0
  %1132 = vmatpush1.msra.mxu0 %v1103
  %1133 = vmatprep.subr.mxu0 0.0
  %1134 = vmatpush1.msra.mxu0 %v1102
  %1135 = vmatprep.subr.mxu0 0.0
  %1136 = vmatpush1.msra.mxu0 %v1101
  %1137 = vmatprep.subr.mxu0 0.0
  %1138 = vmatpush2.msra.mxu0 0.0
  %1139 = vmatprep.subr.mxu0 0.0
  %1140 = vmatpush2.msra.mxu0 0.0
  %1141 = vmatprep.subr.mxu0 0.0
  %1142 = vmatpush2.msra.mxu0 0.0
  %1143 = vmatprep.subr.mxu0 0.0
  %1144 = vmatpush2.msra.mxu0 0.0
  %1145 = vmatprep.subr.mxu0 0.0
  %1146 = vmatpush2.msra.mxu0 0.0
  %1147 = vmatprep.subr.mxu0 0.0
  %1148 = vmatpush2.msra.mxu0 0.0
  %1149 = vmatprep.subr.mxu0 0.0
  %1150 = vmatpush2.msra.mxu0 0.0
  %1151 = vmatprep.subr.mxu0 0.0
  %1152 = vmatpush2.msra.mxu0 0.0
  %1153 = vmatprep.subr.mxu0 0.0
  %1154 = vmatpush2.msra.mxu0 0.0
  %1155 = vmatprep.subr.mxu0 0.0
  %1156 = vmatpush2.msra.mxu0 0.0
  %1157 = vmatprep.subr.mxu0 0.0
  %1158 = vmatpush2.msra.mxu0 0.0
  %1159 = vmatprep.subr.mxu0 0.0
  %1160 = vmatpush2.msra.mxu0 0.0
  %1161 = vmatprep.subr.mxu0 0.0
  %1162 = vmatpush2.msra.mxu0 0.0
  %1163 = vmatprep.subr.mxu0 0.0
  %1164 = vmatpush2.msra.mxu0 0.0
  %1165 = vmatprep.subr.mxu0 0.0
  %1166 = vmatpush2.msra.mxu0 0.0
  %1167 = vmatprep.subr.mxu0 0.0
  %1168 = vmatpush2.msra.mxu0 0.0
  %1169 = vmatprep.mubr.f32.mxu0 0.0
  %1170 = vmatmul.mubr.f32.gmra.mxu0 %v765
  %v1171 = vpop.f32.mrf.mxu0
  %v1172 = vadd.f32 0.0, %v1171
  %v1173 = vpop.f32.mrf.mxu0
  %1174 = vdwg.mxu0
  %v1175 = vadd.f32 %v1078, %v1172
  %v1176 = vadd.f32 %v1175, %v648
  %v1177 = vmul.f32 %v1176, 2.0
  %v1178 = vadd.f32 %v1008, %v1177
  %v1179 = vmul.f32 %v838, 0.025
  %v1180 = vadd.f32 %v652, %v1179
  %1181 = vmatprep.subr.mxu0 0.0
  %1182 = vmatpush1.msra.mxu0 0.0
  %1183 = vmatprep.subr.mxu0 0.0
  %1184 = vmatpush1.msra.mxu0 0.0
  %1185 = vmatprep.subr.mxu0 0.0
  %1186 = vmatpush1.msra.mxu0 0.0
  %1187 = vmatprep.subr.mxu0 0.0
  %1188 = vmatpush1.msra.mxu0 0.0
  %1189 = vmatprep.subr.mxu0 0.0
  %1190 = vmatpush1.msra.mxu0 0.0
  %1191 = vmatprep.subr.mxu0 0.0
  %1192 = vmatpush1.msra.mxu0 0.0
  %1193 = vmatprep.subr.mxu0 0.0
  %1194 = vmatpush1.msra.mxu0 0.0
  %1195 = vmatprep.subr.mxu0 0.0
  %1196 = vmatpush1.msra.mxu0 0.0
  %1197 = vmatprep.subr.mxu0 0.0
  %1198 = vmatpush1.msra.mxu0 0.0
  %1199 = vmatprep.subr.mxu0 0.0
  %1200 = vmatpush1.msra.mxu0 0.0
  %1201 = vmatprep.subr.mxu0 0.0
  %1202 = vmatpush1.msra.mxu0 0.0
  %1203 = vmatprep.subr.mxu0 0.0
  %1204 = vmatpush1.msra.mxu0 0.0
  %1205 = vmatprep.subr.mxu0 0.0
  %1206 = vmatpush1.msra.mxu0 0.0
  %1207 = vmatprep.subr.mxu0 0.0
  %1208 = vmatpush1.msra.mxu0 0.0
  %1209 = vmatprep.subr.mxu0 0.0
  %1210 = vmatpush1.msra.mxu0 0.0
  %1211 = vmatprep.subr.mxu0 0.0
  %1212 = vmatpush1.msra.mxu0 %v1180
  %1213 = vmatprep.subr.mxu0 0.0
  %1214 = vmatpush2.msra.mxu0 0.0
  %1215 = vmatprep.subr.mxu0 0.0
  %1216 = vmatpush2.msra.mxu0 0.0
  %1217 = vmatprep.subr.mxu0 0.0
  %1218 = vmatpush2.msra.mxu0 0.0
  %1219 = vmatprep.subr.mxu0 0.0
  %1220 = vmatpush2.msra.mxu0 0.0
  %1221 = vmatprep.subr.mxu0 0.0
  %1222 = vmatpush2.msra.mxu0 0.0
  %1223 = vmatprep.subr.mxu0 0.0
  %1224 = vmatpush2.msra.mxu0 0.0
  %1225 = vmatprep.subr.mxu0 0.0
  %1226 = vmatpush2.msra.mxu0 0.0
  %1227 = vmatprep.subr.mxu0 0.0
  %1228 = vmatpush2.msra.mxu0 0.0
  %1229 = vmatprep.subr.mxu0 0.0
  %1230 = vmatpush2.msra.mxu0 0.0
  %1231 = vmatprep.subr.mxu0 0.0
  %1232 = vmatpush2.msra.mxu0 0.0
  %1233 = vmatprep.subr.mxu0 0.0
  %1234 = vmatpush2.msra.mxu0 0.0
  %1235 = vmatprep.subr.mxu0 0.0
  %1236 = vmatpush2.msra.mxu0 0.0
  %1237 = vmatprep.subr.mxu0 0.0
  %1238 = vmatpush2.msra.mxu0 0.0
  %1239 = vmatprep.subr.mxu0 0.0
  %1240 = vmatpush2.msra.mxu0 0.0
  %1241 = vmatprep.subr.mxu0 0.0
  %1242 = vmatpush2.msra.mxu0 0.0
  %1243 = vmatprep.subr.mxu0 0.0
  %1244 = vmatpush2.msra.mxu0 0.0
  %1245 = vmatprep.mubr.f32.mxu0 0.0
  %1246 = vmatmul.mubr.f32.gmra.mxu0 %v655
  %v1247 = vpop.f32.mrf.mxu0
  %v1248 = vadd.f32 0.0, %v1247
  %v1249 = vpop.f32.mrf.mxu0
  %1250 = vmatprep.mubr.f32.mxu0 0.0
  %1251 = vmatmul.mubr.f32.gmra.mxu0 %v658
  %v1252 = vpop.f32.mrf.mxu0
  %v1253 = vadd.f32 0.0, %v1252
  %v1254 = vpop.f32.mrf.mxu0
  %1255 = vmatprep.mubr.f32.mxu0 0.0
  %1256 = vmatmul.mubr.f32.gmra.mxu0 %v661
  %v1257 = vpop.f32.mrf.mxu0
  %v1258 = vadd.f32 0.0, %v1257
  %v1259 = vpop.f32.mrf.mxu0
  %1260 = vmatprep.mubr.f32.mxu0 0.0
  %1261 = vmatmul.mubr.f32.gmra.mxu0 %v664
  %v1262 = vpop.f32.mrf.mxu0
  %v1263 = vadd.f32 0.0, %v1262
  %v1264 = vpop.f32.mrf.mxu0
  %1265 = vmatprep.mubr.f32.mxu0 0.0
  %1266 = vmatmul.mubr.f32.gmra.mxu0 %v667
  %v1267 = vpop.f32.mrf.mxu0
  %v1268 = vadd.f32 0.0, %v1267
  %v1269 = vpop.f32.mrf.mxu0
  %1270 = vdwg.mxu0
  %v1271 = vtanh.pop %v1253
  %v1272 = vtanh.pop %v1258
  %v1273 = vtanh.pop %v1263
  %v1274 = vtanh.pop %v1268
  %1275 = vmatprep.subr.mxu0 0.0
  %1276 = vmatpush1.msra.mxu0 0.0
  %1277 = vmatprep.subr.mxu0 0.0
  %1278 = vmatpush1.msra.mxu0 0.0
  %1279 = vmatprep.subr.mxu0 0.0
  %1280 = vmatpush1.msra.mxu0 0.0
  %1281 = vmatprep.subr.mxu0 0.0
  %1282 = vmatpush1.msra.mxu0 0.0
  %1283 = vmatprep.subr.mxu0 0.0
  %1284 = vmatpush1.msra.mxu0 0.0
  %1285 = vmatprep.subr.mxu0 0.0
  %1286 = vmatpush1.msra.mxu0 0.0
  %1287 = vmatprep.subr.mxu0 0.0
  %1288 = vmatpush1.msra.mxu0 0.0
  %1289 = vmatprep.subr.mxu0 0.0
  %1290 = vmatpush1.msra.mxu0 0.0
  %1291 = vmatprep.subr.mxu0 0.0
  %1292 = vmatpush1.msra.mxu0 0.0
  %1293 = vmatprep.subr.mxu0 0.0
  %1294 = vmatpush1.msra.mxu0 0.0
  %1295 = vmatprep.subr.mxu0 0.0
  %1296 = vmatpush1.msra.mxu0 0.0
  %1297 = vmatprep.subr.mxu0 0.0
  %1298 = vmatpush1.msra.mxu0 0.0
  %1299 = vmatprep.subr.mxu0 0.0
  %1300 = vmatpush1.msra.mxu0 %v1274
  %1301 = vmatprep.subr.mxu0 0.0
  %1302 = vmatpush1.msra.mxu0 %v1273
  %1303 = vmatprep.subr.mxu0 0.0
  %1304 = vmatpush1.msra.mxu0 %v1272
  %1305 = vmatprep.subr.mxu0 0.0
  %1306 = vmatpush1.msra.mxu0 %v1271
  %1307 = vmatprep.subr.mxu0 0.0
  %1308 = vmatpush2.msra.mxu0 0.0
  %1309 = vmatprep.subr.mxu0 0.0
  %1310 = vmatpush2.msra.mxu0 0.0
  %1311 = vmatprep.subr.mxu0 0.0
  %1312 = vmatpush2.msra.mxu0 0.0
  %1313 = vmatprep.subr.mxu0 0.0
  %1314 = vmatpush2.msra.mxu0 0.0
  %1315 = vmatprep.subr.mxu0 0.0
  %1316 = vmatpush2.msra.mxu0 0.0
  %1317 = vmatprep.subr.mxu0 0.0
  %1318 = vmatpush2.msra.mxu0 0.0
  %1319 = vmatprep.subr.mxu0 0.0
  %1320 = vmatpush2.msra.mxu0 0.0
  %1321 = vmatprep.subr.mxu0 0.0
  %1322 = vmatpush2.msra.mxu0 0.0
  %1323 = vmatprep.subr.mxu0 0.0
  %1324 = vmatpush2.msra.mxu0 0.0
  %1325 = vmatprep.subr.mxu0 0.0
  %1326 = vmatpush2.msra.mxu0 0.0
  %1327 = vmatprep.subr.mxu0 0.0
  %1328 = vmatpush2.msra.mxu0 0.0
  %1329 = vmatprep.subr.mxu0 0.0
  %1330 = vmatpush2.msra.mxu0 0.0
  %1331 = vmatprep.subr.mxu0 0.0
  %1332 = vmatpush2.msra.mxu0 0.0
  %1333 = vmatprep.subr.mxu0 0.0
  %1334 = vmatpush2.msra.mxu0 0.0
  %1335 = vmatprep.subr.mxu0 0.0
  %1336 = vmatpush2.msra.mxu0 0.0
  %1337 = vmatprep.subr.mxu0 0.0
  %1338 = vmatpush2.msra.mxu0 0.0
  %1339 = vmatprep.mubr.f32.mxu0 0.0
  %1340 = vmatmul.mubr.f32.gmra.mxu0 %v765
  %v1341 = vpop.f32.mrf.mxu0
  %v1342 = vadd.f32 0.0, %v1341
  %v1343 = vpop.f32.mrf.mxu0
  %1344 = vdwg.mxu0
  %v1345 = vadd.f32 %v1248, %v1342
  %v1346 = vadd.f32 %v1345, %v648
  %v1347 = vadd.f32 %v1178, %v1346
  %v1348 = vmul.f32 %v1347, 0.004166667
  %v1349 = vadd.f32 %v163, %v1348
  %1350 = vst [vmem:[%s3] sm:$0xff] %v1349
  %1351 = vst [vmem:[%s3 + $0x8] sm:$0xff] %v168
  // Predicated region
  $region14: #{quadrotor_lls_forward.1} parent=0 // pred_check
    _
  $region15: #{quadrotor_lls_forward.1} parent=0 // pred_check_branch
    %1353 = sbr.rel (0) target = $region17
  $region16: #{quadrotor_lls_forward.1} parent=0 // pred_region
    _
  $region17: #{quadrotor_lls_forward.1} parent=0 // pred_fallthru
    _
  // Predicated region
  $region18: #{quadrotor_lls_forward.1} parent=0 // pred_check
    _
  $region19: #{quadrotor_lls_forward.1} parent=0 // pred_check_branch
    %1355 = sbr.rel (0) target = $region21
  $region20: #{quadrotor_lls_forward.1} parent=0 // pred_region
    _
  $region21: #{quadrotor_lls_forward.1} parent=0 // pred_fallthru
    _

</llo_original>
